<compile_context>
chip_gen: v5e
topology: v5e:2x2
jax: 0.10.0
libtpu: 0.0.40
codegen_flags: <defaults>
</compile_context>

<pallas_src>
import math
import functools

import numpy as np
import jax
import jax.numpy as jnp
from jax import lax
from jax.experimental import pallas as pl
from jax.experimental.pallas import tpu as pltpu


# ----------------------------- Pallas kernel --------------------------------

def _layernorm(x, eps=1e-6):
    # nn.LayerNorm(last_dim, eps=1e-6, elementwise_affine=False)
    mu = jnp.mean(x, axis=-1, keepdims=True)
    var = jnp.mean((x - mu) ** 2, axis=-1, keepdims=True)
    return (x - mu) * lax.rsqrt(var + eps)


def _tgsa_fused_kernel(x_ref, maskq_ref, wqkv_ref, bqkv_ref, wo_ref, bo_ref,
                       wl_ref, bl_ref, *rest,
                       B, T, D, E, is_punish, compute_dtype):
    if is_punish:
        punish_ref, o_ref, act_ref = rest
    else:
        o_ref, act_ref = rest

    l = pl.program_id(0)
    D_E = D // E
    G = B * E

    # Seed the VMEM-resident activation from the kernel input on layer 0.
    @pl.when(l == 0)
    def _seed():
        act_ref[...] = x_ref[...]

    act = act_ref[...]                                   # [B*T, D] f32
    act_lo = act.astype(compute_dtype)

    # fused Q/K/V projection: one [B*T, D] @ [D, 3D] MXU op (bf16 in, f32 acc)
    qkv = jnp.dot(act_lo, wqkv_ref[0],
                  preferred_element_type=jnp.float32) + bqkv_ref[0]   # [B*T, 3D]

    # exact torch head split: Linear(x).permute(0,2,1).reshape(B*E, T, D_E)
    # -> one batched last-two-dims transpose + flat (tile-aligned) reshapes.
    qkv_td = jnp.transpose(qkv.reshape(B, T, 3 * D), (0, 2, 1))       # [B, 3D, T]
    qh = qkv_td[:, 0 * D:1 * D, :].reshape(G, T, D_E)
    kh = qkv_td[:, 1 * D:2 * D, :].reshape(G, T, D_E)
    vh = qkv_td[:, 2 * D:3 * D, :].reshape(G, T, D_E)

    maskq = maskq_ref[...]                               # [B*E, T, D_E] (0/1)
    qh = qh * maskq                                      # Q.mul(mask_q)
    kh = kh * maskq                                      # K.mul(mask_q^T) pre-transpose

    # QK^T / sqrt(T): transpose folded into the contraction (no explicit kh.T)
    s = jnp.einsum('gtd,gsd->gts', qh, kh,
                   preferred_element_type=jnp.float32) * np.float32(1.0 / math.sqrt(T))
    if is_punish:
        s = s * punish_ref[0]                            # [T, T] Gaussian punish
    s = jnp.where(s == 0.0, jnp.float32(-2e20), s)       # masked_fill(==0, -2e20)

    m = jnp.max(s, axis=-1, keepdims=True)               # softmax(dim=2)
    ex = jnp.exp(s - m)
    p = ex * pl.reciprocal(jnp.sum(ex, axis=-1, keepdims=True), approx=True)

    oh = jnp.einsum('gts,gsd->gtd', p, vh,
                    preferred_element_type=jnp.float32)  # [B*E, T, D_E]

    # exact torch merge: .permute(0,2,1).reshape(B, D, T).permute(0,2,1)
    merged = jnp.transpose(
        jnp.transpose(oh, (0, 2, 1)).reshape(B, D, T), (0, 2, 1)
    ).reshape(B * T, D)                                  # lane-dense [B*T, D]

    a = jnp.dot(merged.astype(compute_dtype), wo_ref[0],
                preferred_element_type=jnp.float32) + bo_ref[0]
    x1 = _layernorm(a + act)                             # MHSA residual + LN
    x2 = jnp.dot(x1.astype(compute_dtype), wl_ref[0],
                 preferred_element_type=jnp.float32) + bl_ref[0]
    new_act = _layernorm(x1 + x2)                        # FF residual + LN

    act_ref[...] = new_act                               # carry to next layer
    o_ref[...] = new_act                                 # constant-index out block


# ----------------------------- model glue ------------------------------------

def _tgsa_forward_impl(x, seq_len, params, E, is_punish):
    B, T, D = x.shape
    D_E = D // E
    L = params['wqkv_t'].shape[0]
    compute_dtype = params['wqkv_t'].dtype

    x2d = x.astype(jnp.float32).reshape(B * T, D)

    # mask_q built once in XLA glue (faithful to the torch construction on the
    # reshaped per-head layout); DMA'd once (constant block index).
    t_idx = jnp.arange(T, dtype=jnp.int32)
    mask_bt = (t_idx[None, :] < seq_len[:, None]).astype(jnp.float32)   # [B, T]
    maskq = jnp.broadcast_to(mask_bt[:, None, :, None],
                             (B, E, T, D_E)).reshape(B * E, T, D_E)

    def const_spec(shape):
        return pl.BlockSpec(shape, lambda l, _z=(0,) * len(shape): _z)

    def layer_spec(shape):
        zeros = (0,) * (len(shape) - 1)
        return pl.BlockSpec(shape, lambda l, _z=zeros: (l,) + _z)

    in_arrays = [x2d, maskq,
                 params['wqkv_t'], params['bqkv'],
                 params['wo_t'], params['bo'],
                 params['wl_t'], params['bl']]
    in_specs = [const_spec((B * T, D)), const_spec((B * E, T, D_E)),
                layer_spec((1, D, 3 * D)), layer_spec((1, 1, 3 * D)),
                layer_spec((1, D, D)), layer_spec((1, 1, D)),
                layer_spec((1, D, D)), layer_spec((1, 1, D))]

    if is_punish:
        r = jnp.arange(T, dtype=jnp.float32)
        diff = r[None, :] - r[:, None]                                  # [T, T]
        theta = params['theta'].reshape(L, 1, 1)
        punish = jnp.exp(-(diff[None, :, :] ** 2) / (theta * theta))    # [L, T, T]
        in_arrays.append(punish)
        in_specs.append(layer_spec((1, T, T)))

    kern = functools.partial(_tgsa_fused_kernel, B=B, T=T, D=D, E=E,
                             is_punish=is_punish, compute_dtype=compute_dtype)

    out2d = pl.pallas_call(
        kern,
        out_shape=jax.ShapeDtypeStruct((B * T, D), jnp.float32),
        grid_spec=pltpu.PrefetchScalarGridSpec(
            num_scalar_prefetch=0,
            grid=(L,),
            in_specs=in_specs,
            out_specs=const_spec((B * T, D)),
            scratch_shapes=[pltpu.VMEM((B * T, D), jnp.float32)]),
        compiler_params=pltpu.CompilerParams(
            dimension_semantics=("arbitrary",)),       # layers are sequential
    )(*in_arrays)
    return out2d.reshape(B, T, D)


@functools.partial(jax.jit, static_argnames=("E", "is_punish"))
def tgsa_forward(x, seq_len, params, E, is_punish=True):
    return _tgsa_forward_impl(x, seq_len, params, E, is_punish)


# ----------------------------- parameter init --------------------------------

def _xavier_uniform(key, out_dim, in_dim):
    bound = math.sqrt(6.0 / (in_dim + out_dim))
    return jax.random.uniform(key, (out_dim, in_dim), jnp.float32, -bound, bound)


def init_params(key, D, block_nums, init_theta, weight_dtype=jnp.bfloat16):
    wqkv_t, bqkv, wo_t, bo, wl_t, bl, theta = [], [], [], [], [], [], []
    bb = 1.0 / math.sqrt(D)
    for _ in range(block_nums):
        keys = jax.random.split(key, 11)
        key = keys[0]
        wq = _xavier_uniform(keys[1], D, D)
        bq = jax.random.uniform(keys[2], (D,), jnp.float32, -bb, bb)
        wk = _xavier_uniform(keys[3], D, D)
        bk = jax.random.uniform(keys[4], (D,), jnp.float32, -bb, bb)
        wv = _xavier_uniform(keys[5], D, D)
        bv = jax.random.uniform(keys[6], (D,), jnp.float32, -bb, bb)
        wo = _xavier_uniform(keys[7], D, D)
        bo_ = jax.random.uniform(keys[8], (D,), jnp.float32, -bb, bb)
        wl = _xavier_uniform(keys[9], D, D)
        bl_ = jax.random.uniform(keys[10], (D,), jnp.float32, -bb, bb)
        # torch Linear: y = x @ W.T + b  ->  store W.T, with Q/K/V fused.
        wqkv_t.append(jnp.concatenate([wq, wk, wv], axis=0).T)       # [D, 3D]
        bqkv.append(jnp.concatenate([bq, bk, bv]).reshape(1, 3 * D))
        wo_t.append(wo.T); bo.append(bo_.reshape(1, D))
        wl_t.append(wl.T); bl.append(bl_.reshape(1, D))
        theta.append(init_theta)
    return {
        'wqkv_t': jnp.stack(wqkv_t).astype(weight_dtype),   # [L, D, 3D]
        'bqkv':   jnp.stack(bqkv),                          # [L, 1, 3D] f32
        'wo_t':   jnp.stack(wo_t).astype(weight_dtype),     # [L, D, D]
        'bo':     jnp.stack(bo),                            # [L, 1, D]
        'wl_t':   jnp.stack(wl_t).astype(weight_dtype),     # [L, D, D]
        'bl':     jnp.stack(bl),                            # [L, 1, D]
        'theta':  jnp.asarray(theta, jnp.float32),          # [L]
    }


# --------------------------------- main ---------------------------------------

if __name__ == "__main__":
    # small hparams consistent with the module: B batches, padded T frames,
    # D features, E attention heads, `block_nums` stacked EncoderGSA blocks.
    B, T, D, E, block_nums = 2, 8, 32, 4, 2
    seq_len = jnp.array([8, 6], dtype=jnp.int32)   # max(seq_len) == padded T
    is_punish = True
    init_gaussion_theta = 8.0

    key = jax.random.PRNGKey(0)
    kx, kp = jax.random.split(key)
    x = jax.random.normal(kx, (B, T, D), dtype=jnp.float32)
    params = init_params(kp, D, block_nums, init_gaussion_theta)

    out = tgsa_forward(x, seq_len, params, E=E, is_punish=is_punish)
    out = jax.block_until_ready(out)
    assert out.shape == (B, T, D) and out.dtype == jnp.float32
    assert bool(jnp.all(jnp.isfinite(out)))
    print("KERNEL_OK")

# TODO(synk): TGSAmodel.get_loss (torch.istft + SDRLoss) is training-only glue and
# is not part of forward(); it is intentionally not implemented.
</pallas_src>

<mosaic_0001>
module attributes {stable_mosaic.version = 11 : i64} {
  func.func @_tgsa_fused_kernel(%arg0: i32, %arg1: memref<16x32xf32, #tpu.memory_space<vmem>>, %arg2: memref<8x8x8xf32, #tpu.memory_space<vmem>>, %arg3: memref<1x32x96xbf16, #tpu.memory_space<vmem>>, %arg4: memref<1x1x96xf32, #tpu.memory_space<vmem>>, %arg5: memref<1x32x32xbf16, #tpu.memory_space<vmem>>, %arg6: memref<1x1x32xf32, #tpu.memory_space<vmem>>, %arg7: memref<1x32x32xbf16, #tpu.memory_space<vmem>>, %arg8: memref<1x1x32xf32, #tpu.memory_space<vmem>>, %arg9: memref<1x8x8xf32, #tpu.memory_space<vmem>>, %arg10: memref<16x32xf32, #tpu.memory_space<vmem>>, %arg11: memref<16x32xf32, #tpu.memory_space<vmem>>) attributes {dimension_semantics = [#tpu.dimension_semantics<arbitrary>], iteration_bounds = array<i64: 2>, scalar_prefetch = 0 : i64, scratch_operands = 1 : i64, tpu.core_type = #tpu.core_type<tc>, window_params = [{pipeline_mode = #tpu.pipeline_mode<synchronous>, transform_indices = @transform_0, window_bounds = array<i64: 16, 32>}, {pipeline_mode = #tpu.pipeline_mode<synchronous>, transform_indices = @transform_1, window_bounds = array<i64: 8, 8, 8>}, {transform_indices = @transform_2, window_bounds = array<i64: 1, 32, 96>}, {transform_indices = @transform_3, window_bounds = array<i64: 1, 1, 96>}, {transform_indices = @transform_4, window_bounds = array<i64: 1, 32, 32>}, {transform_indices = @transform_5, window_bounds = array<i64: 1, 1, 32>}, {transform_indices = @transform_6, window_bounds = array<i64: 1, 32, 32>}, {transform_indices = @transform_7, window_bounds = array<i64: 1, 1, 32>}, {transform_indices = @transform_8, window_bounds = array<i64: 1, 8, 8>}, {pipeline_mode = #tpu.pipeline_mode<synchronous>, transform_indices = @transform_9, window_bounds = array<i64: 16, 32>}]} {
    %c0_i32 = arith.constant 0 : i32
    %0 = arith.cmpi eq, %arg0, %c0_i32 : i32
    %1 = arith.extui %0 : i1 to i32
    %c0_i32_0 = arith.constant 0 : i32
    %2 = arith.cmpi ne, %1, %c0_i32_0 : i32
    scf.if %2 {
      %c0_49 = arith.constant 0 : index
      %c0_50 = arith.constant 0 : index
      %106 = vector.load %arg1[%c0_49, %c0_50] : memref<16x32xf32, #tpu.memory_space<vmem>>, vector<16x32xf32>
      %c0_51 = arith.constant 0 : index
      %c0_52 = arith.constant 0 : index
      %107 = vector.load %arg11[%c0_51, %c0_52] : memref<16x32xf32, #tpu.memory_space<vmem>>, vector<16x32xf32>
      tpu.vector_store %arg11[%c0_51, %c0_52], %106 {strides = array<i32>} : memref<16x32xf32, #tpu.memory_space<vmem>>, vector<16x32xf32>,
    } else {
    }
    %c0 = arith.constant 0 : index
    %c0_1 = arith.constant 0 : index
    %3 = vector.load %arg11[%c0, %c0_1] : memref<16x32xf32, #tpu.memory_space<vmem>>, vector<16x32xf32>
    %4 = arith.truncf %3 : vector<16x32xf32> to vector<16x32xbf16>
    %c0_2 = arith.constant 0 : index
    %c0_3 = arith.constant 0 : index
    %c0_4 = arith.constant 0 : index
    %5 = vector.load %arg3[%c0_2, %c0_3, %c0_4] : memref<1x32x96xbf16, #tpu.memory_space<vmem>>, vector<1x32x96xbf16>
    %6 = vector.shape_cast %5 : vector<1x32x96xbf16> to vector<32x96xbf16>
    %cst = arith.constant dense<0.000000e+00> : vector<16x96xf32>
    %7 = tpu.matmul %4, %6, %cst {dimension_numbers = #tpu.dot_dimension_numbers<[1], [0], [0], [1], [0, 0, 1, 1], [], []>} : vector<16x32xbf16>, vector<32x96xbf16>, vector<16x96xf32> -> vector<16x96xf32>
    %c0_5 = arith.constant 0 : index
    %c0_6 = arith.constant 0 : index
    %c0_7 = arith.constant 0 : index
    %8 = vector.load %arg4[%c0_5, %c0_6, %c0_7] : memref<1x1x96xf32, #tpu.memory_space<vmem>>, vector<1x1x96xf32>
    %9 = vector.shape_cast %8 : vector<1x1x96xf32> to vector<1x96xf32>
    %10 = vector.broadcast %9 : vector<1x96xf32> to vector<16x96xf32>
    %11 = arith.addf %7, %10 : vector<16x96xf32>
    %12 = vector.shape_cast %11 : vector<16x96xf32> to vector<2x8x96xf32>
    %13 = tpu.transpose %12, [0, 2, 1] : vector<2x8x96xf32> -> vector<2x96x8xf32>
    %14 = vector.extract_strided_slice %13 {offsets = [0, 0, 0], sizes = [2, 32, 8], strides = [1, 1, 1]} : vector<2x96x8xf32> to vector<2x32x8xf32>
    %15 = vector.shape_cast %14 : vector<2x32x8xf32> to vector<8x8x8xf32>
    %16 = vector.extract_strided_slice %13 {offsets = [0, 32, 0], sizes = [2, 32, 8], strides = [1, 1, 1]} : vector<2x96x8xf32> to vector<2x32x8xf32>
    %17 = vector.shape_cast %16 : vector<2x32x8xf32> to vector<8x8x8xf32>
    %18 = vector.extract_strided_slice %13 {offsets = [0, 64, 0], sizes = [2, 32, 8], strides = [1, 1, 1]} : vector<2x96x8xf32> to vector<2x32x8xf32>
    %19 = vector.shape_cast %18 : vector<2x32x8xf32> to vector<8x8x8xf32>
    %c0_8 = arith.constant 0 : index
    %c0_9 = arith.constant 0 : index
    %c0_10 = arith.constant 0 : index
    %20 = vector.load %arg2[%c0_8, %c0_9, %c0_10] : memref<8x8x8xf32, #tpu.memory_space<vmem>>, vector<8x8x8xf32>
    %21 = arith.mulf %15, %20 : vector<8x8x8xf32>
    %22 = arith.mulf %17, %20 : vector<8x8x8xf32>
    "tpu.trace_start"() <{level = 10 : i32, message = "gtd,gsd->gts"}> : () -> ()
    %cst_11 = arith.constant dense<0.000000e+00> : vector<8x8x8xf32>
    %23 = tpu.matmul %21, %22, %cst_11 {dimension_numbers = #tpu.dot_dimension_numbers<[2], [2], [1], [1], [0, 0, 0, 1, 1, 1], [0], [0]>} : vector<8x8x8xf32>, vector<8x8x8xf32>, vector<8x8x8xf32> -> vector<8x8x8xf32>
    "tpu.trace_stop"() : () -> ()
    %cst_12 = arith.constant 0.353553385 : f32
    %24 = vector.broadcast %cst_12 : f32 to vector<8x8x8xf32>
    %25 = arith.mulf %23, %24 : vector<8x8x8xf32>
    %c0_13 = arith.constant 0 : index
    %c0_14 = arith.constant 0 : index
    %c0_15 = arith.constant 0 : index
    %26 = vector.load %arg9[%c0_13, %c0_14, %c0_15] : memref<1x8x8xf32, #tpu.memory_space<vmem>>, vector<1x8x8xf32>
    %27 = vector.shape_cast %26 : vector<1x8x8xf32> to vector<8x8xf32>
    %28 = vector.shape_cast %27 : vector<8x8xf32> to vector<1x8x8xf32>
    %29 = vector.broadcast %28 : vector<1x8x8xf32> to vector<8x8x8xf32>
    %30 = arith.mulf %25, %29 : vector<8x8x8xf32>
    %cst_16 = arith.constant 0.000000e+00 : f32
    %31 = vector.broadcast %cst_16 : f32 to vector<8x8x8xf32>
    %32 = arith.cmpf oeq, %30, %31 : vector<8x8x8xf32>
    %cst_17 = arith.constant -2.000000e+20 : f32
    %33 = vector.broadcast %cst_17 : f32 to vector<8x8x8xf32>
    %34 = arith.select %32, %33, %30 : vector<8x8x8xi1>, vector<8x8x8xf32>
    %cst_18 = arith.constant dense<0xFF800000> : vector<8x8xf32>
    %35 = vector.multi_reduction <maximumf>, %34, %cst_18 [2] : vector<8x8x8xf32> to vector<8x8xf32>
    %36 = vector.shape_cast %35 : vector<8x8xf32> to vector<8x8x1xf32>
    %37 = vector.broadcast %36 : vector<8x8x1xf32> to vector<8x8x8xf32>
    %38 = arith.subf %34, %37 : vector<8x8x8xf32>
    %39 = math.exp %38 : vector<8x8x8xf32>
    %cst_19 = arith.constant dense<0.000000e+00> : vector<8x8xf32>
    %40 = vector.multi_reduction <add>, %39, %cst_19 [2] : vector<8x8x8xf32> to vector<8x8xf32>
    %41 = vector.shape_cast %40 : vector<8x8xf32> to vector<8x8x1xf32>
    %42 = tpu.reciprocal %41 {approx = true} : vector<8x8x1xf32> -> vector<8x8x1xf32>
    %43 = vector.broadcast %42 : vector<8x8x1xf32> to vector<8x8x8xf32>
    %44 = arith.mulf %39, %43 : vector<8x8x8xf32>
    "tpu.trace_start"() <{level = 10 : i32, message = "gts,gsd->gtd"}> : () -> ()
    %cst_20 = arith.constant dense<0.000000e+00> : vector<8x8x8xf32>
    %45 = tpu.matmul %44, %19, %cst_20 {dimension_numbers = #tpu.dot_dimension_numbers<[2], [1], [1], [2], [0, 0, 0, 1, 1, 2], [0], [0]>} : vector<8x8x8xf32>, vector<8x8x8xf32>, vector<8x8x8xf32> -> vector<8x8x8xf32>
    "tpu.trace_stop"() : () -> ()
    %46 = tpu.transpose %45, [0, 2, 1] : vector<8x8x8xf32> -> vector<8x8x8xf32>
    %47 = vector.shape_cast %46 : vector<8x8x8xf32> to vector<2x32x8xf32>
    %48 = tpu.transpose %47, [0, 2, 1] : vector<2x32x8xf32> -> vector<2x8x32xf32>
    %49 = vector.shape_cast %48 : vector<2x8x32xf32> to vector<16x32xf32>
    %50 = arith.truncf %49 : vector<16x32xf32> to vector<16x32xbf16>
    %c0_21 = arith.constant 0 : index
    %c0_22 = arith.constant 0 : index
    %c0_23 = arith.constant 0 : index
    %51 = vector.load %arg5[%c0_21, %c0_22, %c0_23] : memref<1x32x32xbf16, #tpu.memory_space<vmem>>, vector<1x32x32xbf16>
    %52 = vector.shape_cast %51 : vector<1x32x32xbf16> to vector<32x32xbf16>
    %cst_24 = arith.constant dense<0.000000e+00> : vector<16x32xf32>
    %53 = tpu.matmul %50, %52, %cst_24 {dimension_numbers = #tpu.dot_dimension_numbers<[1], [0], [0], [1], [0, 0, 1, 1], [], []>} : vector<16x32xbf16>, vector<32x32xbf16>, vector<16x32xf32> -> vector<16x32xf32>
    %c0_25 = arith.constant 0 : index
    %c0_26 = arith.constant 0 : index
    %c0_27 = arith.constant 0 : index
    %54 = vector.load %arg6[%c0_25, %c0_26, %c0_27] : memref<1x1x32xf32, #tpu.memory_space<vmem>>, vector<1x1x32xf32>
    %55 = vector.shape_cast %54 : vector<1x1x32xf32> to vector<1x32xf32>
    %56 = vector.broadcast %55 : vector<1x32xf32> to vector<16x32xf32>
    %57 = arith.addf %53, %56 : vector<16x32xf32>
    %58 = arith.addf %57, %3 : vector<16x32xf32>
    %cst_28 = arith.constant dense<0.000000e+00> : vector<16xf32>
    %59 = vector.multi_reduction <add>, %58, %cst_28 [1] : vector<16x32xf32> to vector<16xf32>
    %60 = vector.shape_cast %59 : vector<16xf32> to vector<16x1xf32>
    %cst_29 = arith.constant 3.200000e+01 : f32
    %61 = vector.broadcast %cst_29 : f32 to vector<16x1xf32>
    %62 = arith.divf %60, %61 : vector<16x1xf32>
    %63 = vector.broadcast %62 : vector<16x1xf32> to vector<16x32xf32>
    %64 = arith.subf %58, %63 : vector<16x32xf32>
    %65 = arith.mulf %64, %64 : vector<16x32xf32>
    %cst_30 = arith.constant dense<0.000000e+00> : vector<16xf32>
    %66 = vector.multi_reduction <add>, %65, %cst_30 [1] : vector<16x32xf32> to vector<16xf32>
    %67 = vector.shape_cast %66 : vector<16xf32> to vector<16x1xf32>
    %cst_31 = arith.constant 3.200000e+01 : f32
    %68 = vector.broadcast %cst_31 : f32 to vector<16x1xf32>
    %69 = arith.divf %67, %68 : vector<16x1xf32>
    %70 = vector.broadcast %62 : vector<16x1xf32> to vector<16x32xf32>
    %71 = arith.subf %58, %70 : vector<16x32xf32>
    %cst_32 = arith.constant 9.99999997E-7 : f32
    %72 = vector.broadcast %cst_32 : f32 to vector<16x1xf32>
    %73 = arith.addf %69, %72 : vector<16x1xf32>
    %74 = math.rsqrt %73 : vector<16x1xf32>
    %75 = vector.broadcast %74 : vector<16x1xf32> to vector<16x32xf32>
    %76 = arith.mulf %71, %75 : vector<16x32xf32>
    %77 = arith.truncf %76 : vector<16x32xf32> to vector<16x32xbf16>
    %c0_33 = arith.constant 0 : index
    %c0_34 = arith.constant 0 : index
    %c0_35 = arith.constant 0 : index
    %78 = vector.load %arg7[%c0_33, %c0_34, %c0_35] : memref<1x32x32xbf16, #tpu.memory_space<vmem>>, vector<1x32x32xbf16>
    %79 = vector.shape_cast %78 : vector<1x32x32xbf16> to vector<32x32xbf16>
    %cst_36 = arith.constant dense<0.000000e+00> : vector<16x32xf32>
    %80 = tpu.matmul %77, %79, %cst_36 {dimension_numbers = #tpu.dot_dimension_numbers<[1], [0], [0], [1], [0, 0, 1, 1], [], []>} : vector<16x32xbf16>, vector<32x32xbf16>, vector<16x32xf32> -> vector<16x32xf32>
    %c0_37 = arith.constant 0 : index
    %c0_38 = arith.constant 0 : index
    %c0_39 = arith.constant 0 : index
    %81 = vector.load %arg8[%c0_37, %c0_38, %c0_39] : memref<1x1x32xf32, #tpu.memory_space<vmem>>, vector<1x1x32xf32>
    %82 = vector.shape_cast %81 : vector<1x1x32xf32> to vector<1x32xf32>
    %83 = vector.broadcast %82 : vector<1x32xf32> to vector<16x32xf32>
    %84 = arith.addf %80, %83 : vector<16x32xf32>
    %85 = arith.addf %76, %84 : vector<16x32xf32>
    %cst_40 = arith.constant dense<0.000000e+00> : vector<16xf32>
    %86 = vector.multi_reduction <add>, %85, %cst_40 [1] : vector<16x32xf32> to vector<16xf32>
    %87 = vector.shape_cast %86 : vector<16xf32> to vector<16x1xf32>
    %cst_41 = arith.constant 3.200000e+01 : f32
    %88 = vector.broadcast %cst_41 : f32 to vector<16x1xf32>
    %89 = arith.divf %87, %88 : vector<16x1xf32>
    %90 = vector.broadcast %89 : vector<16x1xf32> to vector<16x32xf32>
    %91 = arith.subf %85, %90 : vector<16x32xf32>
    %92 = arith.mulf %91, %91 : vector<16x32xf32>
    %cst_42 = arith.constant dense<0.000000e+00> : vector<16xf32>
    %93 = vector.multi_reduction <add>, %92, %cst_42 [1] : vector<16x32xf32> to vector<16xf32>
    %94 = vector.shape_cast %93 : vector<16xf32> to vector<16x1xf32>
    %cst_43 = arith.constant 3.200000e+01 : f32
    %95 = vector.broadcast %cst_43 : f32 to vector<16x1xf32>
    %96 = arith.divf %94, %95 : vector<16x1xf32>
    %97 = vector.broadcast %89 : vector<16x1xf32> to vector<16x32xf32>
    %98 = arith.subf %85, %97 : vector<16x32xf32>
    %cst_44 = arith.constant 9.99999997E-7 : f32
    %99 = vector.broadcast %cst_44 : f32 to vector<16x1xf32>
    %100 = arith.addf %96, %99 : vector<16x1xf32>
    %101 = math.rsqrt %100 : vector<16x1xf32>
    %102 = vector.broadcast %101 : vector<16x1xf32> to vector<16x32xf32>
    %103 = arith.mulf %98, %102 : vector<16x32xf32>
    %c0_45 = arith.constant 0 : index
    %c0_46 = arith.constant 0 : index
    %104 = vector.load %arg11[%c0_45, %c0_46] : memref<16x32xf32, #tpu.memory_space<vmem>>, vector<16x32xf32>
    tpu.vector_store %arg11[%c0_45, %c0_46], %103 {strides = array<i32>} : memref<16x32xf32, #tpu.memory_space<vmem>>, vector<16x32xf32>,
    %c0_47 = arith.constant 0 : index
    %c0_48 = arith.constant 0 : index
    %105 = vector.load %arg10[%c0_47, %c0_48] : memref<16x32xf32, #tpu.memory_space<vmem>>, vector<16x32xf32>
    tpu.vector_store %arg10[%c0_47, %c0_48], %103 {strides = array<i32>} : memref<16x32xf32, #tpu.memory_space<vmem>>, vector<16x32xf32>,
    return
  }
  func.func @transform_0(%arg0: i32) -> (i32, i32) {
    %c0_i32 = arith.constant 0 : i32
    %c0_i32_0 = arith.constant 0 : i32
    %c0_i32_1 = arith.constant 0 : i32
    return %c0_i32, %c0_i32_0 : i32, i32
  }
  func.func @transform_1(%arg0: i32) -> (i32, i32, i32) {
    %c0_i32 = arith.constant 0 : i32
    %c0_i32_0 = arith.constant 0 : i32
    %c0_i32_1 = arith.constant 0 : i32
    %c0_i32_2 = arith.constant 0 : i32
    return %c0_i32, %c0_i32_0, %c0_i32_1 : i32, i32, i32
  }
  func.func @transform_2(%arg0: i32) -> (i32, i32, i32) {
    %c0_i32 = arith.constant 0 : i32
    %c0_i32_0 = arith.constant 0 : i32
    %c0_i32_1 = arith.constant 0 : i32
    return %arg0, %c0_i32, %c0_i32_0 : i32, i32, i32
  }
  func.func @transform_3(%arg0: i32) -> (i32, i32, i32) {
    %c0_i32 = arith.constant 0 : i32
    %c0_i32_0 = arith.constant 0 : i32
    %c0_i32_1 = arith.constant 0 : i32
    return %arg0, %c0_i32, %c0_i32_0 : i32, i32, i32
  }
  func.func @transform_4(%arg0: i32) -> (i32, i32, i32) {
    %c0_i32 = arith.constant 0 : i32
    %c0_i32_0 = arith.constant 0 : i32
    %c0_i32_1 = arith.constant 0 : i32
    return %arg0, %c0_i32, %c0_i32_0 : i32, i32, i32
  }
  func.func @transform_5(%arg0: i32) -> (i32, i32, i32) {
    %c0_i32 = arith.constant 0 : i32
    %c0_i32_0 = arith.constant 0 : i32
    %c0_i32_1 = arith.constant 0 : i32
    return %arg0, %c0_i32, %c0_i32_0 : i32, i32, i32
  }
  func.func @transform_6(%arg0: i32) -> (i32, i32, i32) {
    %c0_i32 = arith.constant 0 : i32
    %c0_i32_0 = arith.constant 0 : i32
    %c0_i32_1 = arith.constant 0 : i32
    return %arg0, %c0_i32, %c0_i32_0 : i32, i32, i32
  }
  func.func @transform_7(%arg0: i32) -> (i32, i32, i32) {
    %c0_i32 = arith.constant 0 : i32
    %c0_i32_0 = arith.constant 0 : i32
    %c0_i32_1 = arith.constant 0 : i32
    return %arg0, %c0_i32, %c0_i32_0 : i32, i32, i32
  }
  func.func @transform_8(%arg0: i32) -> (i32, i32, i32) {
    %c0_i32 = arith.constant 0 : i32
    %c0_i32_0 = arith.constant 0 : i32
    %c0_i32_1 = arith.constant 0 : i32
    return %arg0, %c0_i32, %c0_i32_0 : i32, i32, i32
  }
  func.func @transform_9(%arg0: i32) -> (i32, i32) {
    %c0_i32 = arith.constant 0 : i32
    %c0_i32_0 = arith.constant 0 : i32
    %c0_i32_1 = arith.constant 0 : i32
    return %c0_i32, %c0_i32_0 : i32, i32
  }
}

</mosaic_0001>

<llo_original>
// kernel: mul.0
$region0: #{mul.0}
  #allocation0 [shape = 's32[1]{0}', space=sflag, size = 0x4, scoped, tag = 'scoped memory for mul.0']
  %s0 = inlined_call_operand.vmem [shape: f32[2], index: 0, kind: input, shape index: {}, may-alias: {0,1}]
  %s1 = inlined_call_operand.vmem [shape: f32[2], index: 1, kind: input, shape index: {}, may-alias: {0,1}]
  %s2 = inlined_call_operand.vmem [shape: f32[2], index: 2, kind: output, shape index: {}]
  %v3 = vld [vmem:[%s0] sm:$0x1]
  %v4 = vld [vmem:[%s1] sm:$0x1]
  %5 = xla_tuple %v3, %v4
  %6 = xla_tuple %5
  %v7 = vmul.f32 %v3, %v4
  %8 = xla_tuple %v7
  %9 = vst [vmem:[%s2] sm:$0x1] %v7

// kernel: tgsa_forward.1
$region0: #{tgsa_forward.1}
  #allocation0 [shape = 'u32[]', space=smem, size = 0x4, offset = 0x4, fixed_abs, tag = 'smem constant byte address 0x4 - core index']
  #allocation1 [shape = 'u32[72,128]{1,0:T(1,128)}', space=vmem, size = 0x9000, scoped, tag = 'internal scratch']
  #allocation2 [shape = 'f32[16,32]{1,0:T(8,128)}', space=vmem, size = 0x2000, scoped, tag = 'scratch operand']
  %s0 = inlined_call_operand.vmem [shape: f32[16,32], index: 0, kind: input, shape index: {}]
  %s1 = inlined_call_operand.vmem [shape: f32[8,8,8], index: 1, kind: input, shape index: {}]
  %s2 = inlined_call_operand.vmem [shape: bf16[2,32,96], index: 2, kind: input, shape index: {}]
  %s3 = inlined_call_operand.vmem [shape: f32[2,1,96], index: 3, kind: input, shape index: {}]
  %s4 = inlined_call_operand.vmem [shape: bf16[2,32,32], index: 4, kind: input, shape index: {}]
  %s5 = inlined_call_operand.vmem [shape: f32[2,1,32], index: 5, kind: input, shape index: {}]
  %s6 = inlined_call_operand.vmem [shape: bf16[2,32,32], index: 6, kind: input, shape index: {}]
  %s7 = inlined_call_operand.vmem [shape: f32[2,1,32], index: 7, kind: input, shape index: {}]
  %s8 = inlined_call_operand.vmem [shape: f32[2,8,8], index: 8, kind: input, shape index: {}]
  %s9 = inlined_call_operand.hbm [shape: f32[16,32], index: 9, kind: output, shape index: {}]
  %s10 = sld [smem:[#allocation0]]
  $region73: #{tgsa_forward.1} parent=0
    _
  %s12 = ssub.s32 1, %s10
  %s13 = scalar_select 0, %s12, %s10
  $region1: #{tgsa_forward.1} parent=0
    #allocation3 [shape = 'u8[8192]{0}', space=vmem, size = 0x2000, scoped, tag = 'output window, operand 0, single buffered']
    #allocation4 [shape = 's32[2]{0}', space=sflag, size = 0x8, scoped, tag = 'scoped memory for tgsa_forward.1']
    %14 = vsyncpa [#allocation4], 0
    loop: start=0, step=1, limit=4
    $region2: #{tgsa_forward.1} parent=1 // loop_pre_header
      _
    $region3: #{tgsa_forward.1} parent=1 // loop_header
      %s16 = sphi 0, %s20
      %p17 = scmp.ge.s32.totalorder %s16, 4
      %s24 = sphi 0, %s24
      %s26 = sphi 0, %s24
      %s27 = sphi 0, %s26
      %s41 = sphi 0, %s27
      %s45 = sphi 0, %s45
      %s47 = sphi 0, %s45
      %s48 = sphi 0, %s47
      %s62 = sphi 0, %s48
      %s68 = sphi 0, %s70
      %s71 = sphi 0, %s68
      %s72 = sphi 0, %s71
      %s88 = sphi 0, %s72
      %s94 = sphi 0, %s96
      %s97 = sphi 0, %s94
      %s98 = sphi 0, %s97
      %s114 = sphi 0, %s98
      %s120 = sphi 0, %s122
      %s123 = sphi 0, %s120
      %s124 = sphi 0, %s123
      %s140 = sphi 0, %s124
      %s146 = sphi 0, %s148
      %s149 = sphi 0, %s146
      %s150 = sphi 0, %s149
      %s166 = sphi 0, %s150
      %s172 = sphi 0, %s174
      %s175 = sphi 0, %s172
      %s176 = sphi 0, %s175
      %s192 = sphi 0, %s176
      %s198 = sphi 0, %s200
      %s201 = sphi 0, %s198
      %s202 = sphi 0, %s201
      %s218 = sphi 0, %s202
      %s224 = sphi 0, %s226
      %s227 = sphi 0, %s224
      %s228 = sphi 0, %s227
      %s244 = sphi 0, %s228
      %s248 = sphi 0, %s248
      %s250 = sphi 0, %s248
      %s251 = sphi 0, %s250
      %s265 = sphi 0, %s251
    $region4: #{tgsa_forward.1} parent=1 // loop_header_branch
      %19 = sbr.rel (%p17) target = $region8
    $region5: #{tgsa_forward.1} parent=1 // loop_body
      %s21 = ssub.s32 %s16, 1
      %s22 = ssub.s32 %s16, 2
      %s23 = sadd.s32 %s16, 1
      %s25 = sadd.s32 %s24, 1
      %p28 = scmp.eq.s32.totalorder %s16, 1
      %p29 = scmp.ne.s32.totalorder %s24, %s26
      %p30 = scmp.eq.s32.totalorder %s16, 0
      %p31 = por %p29, %p30
      %p32 = scmp.ne.s32.totalorder %s24, %s26
      %p33 = scmp.eq.s32.totalorder %s21, 1
      %p34 = por %p32, %p33
      %p35 = scmp.ne.s32.totalorder %s26, %s27
      %p36 = scmp.eq.s32.totalorder %s21, 0
      %p37 = por %p35, %p36
      %p38 = scmp.ne.s32.totalorder %s26, %s27
      %p39 = scmp.eq.s32.totalorder %s22, 1
      %p40 = por %p38, %p39
      %p42 = scmp.ne.s32.totalorder %s27, %s41
      %p43 = scmp.eq.s32.totalorder %s22, 0
      %p44 = por %p42, %p43
      %s46 = sadd.s32 %s45, 1
      %p49 = scmp.eq.s32.totalorder %s16, 1
      %p50 = scmp.ne.s32.totalorder %s45, %s47
      %p51 = scmp.eq.s32.totalorder %s16, 0
      %p52 = por %p50, %p51
      %p53 = scmp.ne.s32.totalorder %s45, %s47
      %p54 = scmp.eq.s32.totalorder %s21, 1
      %p55 = por %p53, %p54
      %p56 = scmp.ne.s32.totalorder %s47, %s48
      %p57 = scmp.eq.s32.totalorder %s21, 0
      %p58 = por %p56, %p57
      %p59 = scmp.ne.s32.totalorder %s47, %s48
      %p60 = scmp.eq.s32.totalorder %s22, 1
      %p61 = por %p59, %p60
      %p63 = scmp.ne.s32.totalorder %s48, %s62
      %p64 = scmp.eq.s32.totalorder %s22, 0
      %p65 = por %p63, %p64
      %s66 = ssub.s32 %s16, %s23
      %p67 = scmp.eq.s32.totalorder %s66, 0
      %s69 = sadd.s32 %s68, 1
      %s70 = scalar_select %p67, %s68, %s69
      %p73 = pneg %p67
      %p74 = scmp.eq.s32.totalorder %s16, 1
      %p75 = por %p73, %p74
      %p76 = scmp.ne.s32.totalorder %s68, %s71
      %p77 = scmp.eq.s32.totalorder %s16, 0
      %p78 = por %p76, %p77
      %p79 = scmp.ne.s32.totalorder %s68, %s71
      %p80 = scmp.eq.s32.totalorder %s21, 1
      %p81 = por %p79, %p80
      %p82 = scmp.ne.s32.totalorder %s71, %s72
      %p83 = scmp.eq.s32.totalorder %s21, 0
      %p84 = por %p82, %p83
      %p85 = scmp.ne.s32.totalorder %s71, %s72
      %p86 = scmp.eq.s32.totalorder %s22, 1
      %p87 = por %p85, %p86
      %p89 = scmp.ne.s32.totalorder %s72, %s88
      %p90 = scmp.eq.s32.totalorder %s22, 0
      %p91 = por %p89, %p90
      %s92 = ssub.s32 %s16, %s23
      %p93 = scmp.eq.s32.totalorder %s92, 0
      %s95 = sadd.s32 %s94, 1
      %s96 = scalar_select %p93, %s94, %s95
      %p99 = pneg %p93
      %p100 = scmp.eq.s32.totalorder %s16, 1
      %p101 = por %p99, %p100
      %p102 = scmp.ne.s32.totalorder %s94, %s97
      %p103 = scmp.eq.s32.totalorder %s16, 0
      %p104 = por %p102, %p103
      %p105 = scmp.ne.s32.totalorder %s94, %s97
      %p106 = scmp.eq.s32.totalorder %s21, 1
      %p107 = por %p105, %p106
      %p108 = scmp.ne.s32.totalorder %s97, %s98
      %p109 = scmp.eq.s32.totalorder %s21, 0
      %p110 = por %p108, %p109
      %p111 = scmp.ne.s32.totalorder %s97, %s98
      %p112 = scmp.eq.s32.totalorder %s22, 1
      %p113 = por %p111, %p112
      %p115 = scmp.ne.s32.totalorder %s98, %s114
      %p116 = scmp.eq.s32.totalorder %s22, 0
      %p117 = por %p115, %p116
      %s118 = ssub.s32 %s16, %s23
      %p119 = scmp.eq.s32.totalorder %s118, 0
      %s121 = sadd.s32 %s120, 1
      %s122 = scalar_select %p119, %s120, %s121
      %p125 = pneg %p119
      %p126 = scmp.eq.s32.totalorder %s16, 1
      %p127 = por %p125, %p126
      %p128 = scmp.ne.s32.totalorder %s120, %s123
      %p129 = scmp.eq.s32.totalorder %s16, 0
      %p130 = por %p128, %p129
      %p131 = scmp.ne.s32.totalorder %s120, %s123
      %p132 = scmp.eq.s32.totalorder %s21, 1
      %p133 = por %p131, %p132
      %p134 = scmp.ne.s32.totalorder %s123, %s124
      %p135 = scmp.eq.s32.totalorder %s21, 0
      %p136 = por %p134, %p135
      %p137 = scmp.ne.s32.totalorder %s123, %s124
      %p138 = scmp.eq.s32.totalorder %s22, 1
      %p139 = por %p137, %p138
      %p141 = scmp.ne.s32.totalorder %s124, %s140
      %p142 = scmp.eq.s32.totalorder %s22, 0
      %p143 = por %p141, %p142
      %s144 = ssub.s32 %s16, %s23
      %p145 = scmp.eq.s32.totalorder %s144, 0
      %s147 = sadd.s32 %s146, 1
      %s148 = scalar_select %p145, %s146, %s147
      %p151 = pneg %p145
      %p152 = scmp.eq.s32.totalorder %s16, 1
      %p153 = por %p151, %p152
      %p154 = scmp.ne.s32.totalorder %s146, %s149
      %p155 = scmp.eq.s32.totalorder %s16, 0
      %p156 = por %p154, %p155
      %p157 = scmp.ne.s32.totalorder %s146, %s149
      %p158 = scmp.eq.s32.totalorder %s21, 1
      %p159 = por %p157, %p158
      %p160 = scmp.ne.s32.totalorder %s149, %s150
      %p161 = scmp.eq.s32.totalorder %s21, 0
      %p162 = por %p160, %p161
      %p163 = scmp.ne.s32.totalorder %s149, %s150
      %p164 = scmp.eq.s32.totalorder %s22, 1
      %p165 = por %p163, %p164
      %p167 = scmp.ne.s32.totalorder %s150, %s166
      %p168 = scmp.eq.s32.totalorder %s22, 0
      %p169 = por %p167, %p168
      %s170 = ssub.s32 %s16, %s23
      %p171 = scmp.eq.s32.totalorder %s170, 0
      %s173 = sadd.s32 %s172, 1
      %s174 = scalar_select %p171, %s172, %s173
      %p177 = pneg %p171
      %p178 = scmp.eq.s32.totalorder %s16, 1
      %p179 = por %p177, %p178
      %p180 = scmp.ne.s32.totalorder %s172, %s175
      %p181 = scmp.eq.s32.totalorder %s16, 0
      %p182 = por %p180, %p181
      %p183 = scmp.ne.s32.totalorder %s172, %s175
      %p184 = scmp.eq.s32.totalorder %s21, 1
      %p185 = por %p183, %p184
      %p186 = scmp.ne.s32.totalorder %s175, %s176
      %p187 = scmp.eq.s32.totalorder %s21, 0
      %p188 = por %p186, %p187
      %p189 = scmp.ne.s32.totalorder %s175, %s176
      %p190 = scmp.eq.s32.totalorder %s22, 1
      %p191 = por %p189, %p190
      %p193 = scmp.ne.s32.totalorder %s176, %s192
      %p194 = scmp.eq.s32.totalorder %s22, 0
      %p195 = por %p193, %p194
      %s196 = ssub.s32 %s16, %s23
      %p197 = scmp.eq.s32.totalorder %s196, 0
      %s199 = sadd.s32 %s198, 1
      %s200 = scalar_select %p197, %s198, %s199
      %p203 = pneg %p197
      %p204 = scmp.eq.s32.totalorder %s16, 1
      %p205 = por %p203, %p204
      %p206 = scmp.ne.s32.totalorder %s198, %s201
      %p207 = scmp.eq.s32.totalorder %s16, 0
      %p208 = por %p206, %p207
      %p209 = scmp.ne.s32.totalorder %s198, %s201
      %p210 = scmp.eq.s32.totalorder %s21, 1
      %p211 = por %p209, %p210
      %p212 = scmp.ne.s32.totalorder %s201, %s202
      %p213 = scmp.eq.s32.totalorder %s21, 0
      %p214 = por %p212, %p213
      %p215 = scmp.ne.s32.totalorder %s201, %s202
      %p216 = scmp.eq.s32.totalorder %s22, 1
      %p217 = por %p215, %p216
      %p219 = scmp.ne.s32.totalorder %s202, %s218
      %p220 = scmp.eq.s32.totalorder %s22, 0
      %p221 = por %p219, %p220
      %s222 = ssub.s32 %s16, %s23
      %p223 = scmp.eq.s32.totalorder %s222, 0
      %s225 = sadd.s32 %s224, 1
      %s226 = scalar_select %p223, %s224, %s225
      %p229 = pneg %p223
      %p230 = scmp.eq.s32.totalorder %s16, 1
      %p231 = por %p229, %p230
      %p232 = scmp.ne.s32.totalorder %s224, %s227
      %p233 = scmp.eq.s32.totalorder %s16, 0
      %p234 = por %p232, %p233
      %p235 = scmp.ne.s32.totalorder %s224, %s227
      %p236 = scmp.eq.s32.totalorder %s21, 1
      %p237 = por %p235, %p236
      %p238 = scmp.ne.s32.totalorder %s227, %s228
      %p239 = scmp.eq.s32.totalorder %s21, 0
      %p240 = por %p238, %p239
      %p241 = scmp.ne.s32.totalorder %s227, %s228
      %p242 = scmp.eq.s32.totalorder %s22, 1
      %p243 = por %p241, %p242
      %p245 = scmp.ne.s32.totalorder %s228, %s244
      %p246 = scmp.eq.s32.totalorder %s22, 0
      %p247 = por %p245, %p246
      %s249 = sadd.s32 %s248, 1
      %p252 = scmp.eq.s32.totalorder %s16, 1
      %p253 = scmp.ne.s32.totalorder %s248, %s250
      %p254 = scmp.eq.s32.totalorder %s16, 0
      %p255 = por %p253, %p254
      %p256 = scmp.ne.s32.totalorder %s248, %s250
      %p257 = scmp.eq.s32.totalorder %s21, 1
      %p258 = por %p256, %p257
      %p259 = scmp.ne.s32.totalorder %s250, %s251
      %p260 = scmp.eq.s32.totalorder %s21, 0
      %p261 = por %p259, %p260
      %p262 = scmp.ne.s32.totalorder %s250, %s251
      %p263 = scmp.eq.s32.totalorder %s22, 1
      %p264 = por %p262, %p263
      %p266 = scmp.ne.s32.totalorder %s251, %s265
      %p267 = scmp.eq.s32.totalorder %s22, 0
      %p268 = por %p266, %p267
      %p269 = scmp.le.s32.totalorder 1, %s16
      %p270 = scmp.lt.s32.totalorder %s16, 3
      %p271 = pnand %p269, %p270
      %p272 = pneg %p271
      // Predicated region
      $region9: #{tgsa_forward.1} parent=5 // pred_check
        _
      $region10: #{tgsa_forward.1} parent=5 // pred_check_branch
        %274 = sbr.rel (%p271) target = $region12
      $region11: #{tgsa_forward.1} parent=5 // pred_region
        %s275 = ssub.s32 %s16, 1
        // Predicated region
        $region13: #{tgsa_forward.1} parent=11 // pred_check
          %p276 = pneg %p37
        $region14: #{tgsa_forward.1} parent=11 // pred_check_branch
          %278 = sbr.rel (%p276) target = $region16
        $region15: #{tgsa_forward.1} parent=11 // pred_region
          _
        $region16: #{tgsa_forward.1} parent=11 // pred_fallthru
          _
        // Predicated region
        $region17: #{tgsa_forward.1} parent=11 // pred_check
          %p279 = pneg %p58
        $region18: #{tgsa_forward.1} parent=11 // pred_check_branch
          %281 = sbr.rel (%p279) target = $region20
        $region19: #{tgsa_forward.1} parent=11 // pred_region
          _
        $region20: #{tgsa_forward.1} parent=11 // pred_fallthru
          _
      $region12: #{tgsa_forward.1} parent=5 // pred_fallthru
        _
      %p282 = scmp.lt.s32.totalorder %s16, 2
      // Predicated region
      $region21: #{tgsa_forward.1} parent=5 // pred_check
        %p283 = pneg %p282
      $region22: #{tgsa_forward.1} parent=5 // pred_check_branch
        %285 = sbr.rel (%p283) target = $region24
      $region23: #{tgsa_forward.1} parent=5 // pred_region
        // Predicated region
        $region25: #{tgsa_forward.1} parent=23 // pred_check
          %p286 = pneg %p78
        $region26: #{tgsa_forward.1} parent=23 // pred_check_branch
          %288 = sbr.rel (%p286) target = $region28
        $region27: #{tgsa_forward.1} parent=23 // pred_region
          %p289 = scmp.lt.s32.totalorder %s16, 1
          %s290 = scalar_select %p289, %s16, 1
          %s291 = smul.addr %s290, 4
          %s292 = smul.addr %s291, 4
          %s293 = scalar_lea.vmem %s2, %s292
        $region28: #{tgsa_forward.1} parent=23 // pred_fallthru
          _
        // Predicated region
        $region29: #{tgsa_forward.1} parent=23 // pred_check
          %p294 = pneg %p104
        $region30: #{tgsa_forward.1} parent=23 // pred_check_branch
          %296 = sbr.rel (%p294) target = $region32
        $region31: #{tgsa_forward.1} parent=23 // pred_region
          %p297 = scmp.lt.s32.totalorder %s16, 1
          %s298 = scalar_select %p297, %s16, 1
          %s299 = scalar_lea.vmem %s3, %s298
        $region32: #{tgsa_forward.1} parent=23 // pred_fallthru
          _
        // Predicated region
        $region33: #{tgsa_forward.1} parent=23 // pred_check
          %p300 = pneg %p130
        $region34: #{tgsa_forward.1} parent=23 // pred_check_branch
          %302 = sbr.rel (%p300) target = $region36
        $region35: #{tgsa_forward.1} parent=23 // pred_region
          %p303 = scmp.lt.s32.totalorder %s16, 1
          %s304 = scalar_select %p303, %s16, 1
          %s305 = smul.addr %s304, 4
          %s306 = smul.addr %s305, 4
          %s307 = scalar_lea.vmem %s4, %s306
        $region36: #{tgsa_forward.1} parent=23 // pred_fallthru
          _
        // Predicated region
        $region37: #{tgsa_forward.1} parent=23 // pred_check
          %p308 = pneg %p156
        $region38: #{tgsa_forward.1} parent=23 // pred_check_branch
          %310 = sbr.rel (%p308) target = $region40
        $region39: #{tgsa_forward.1} parent=23 // pred_region
          %p311 = scmp.lt.s32.totalorder %s16, 1
          %s312 = scalar_select %p311, %s16, 1
          %s313 = scalar_lea.vmem %s5, %s312
        $region40: #{tgsa_forward.1} parent=23 // pred_fallthru
          _
        // Predicated region
        $region41: #{tgsa_forward.1} parent=23 // pred_check
          %p314 = pneg %p182
        $region42: #{tgsa_forward.1} parent=23 // pred_check_branch
          %316 = sbr.rel (%p314) target = $region44
        $region43: #{tgsa_forward.1} parent=23 // pred_region
          %p317 = scmp.lt.s32.totalorder %s16, 1
          %s318 = scalar_select %p317, %s16, 1
          %s319 = smul.addr %s318, 4
          %s320 = smul.addr %s319, 4
          %s321 = scalar_lea.vmem %s6, %s320
        $region44: #{tgsa_forward.1} parent=23 // pred_fallthru
          _
        // Predicated region
        $region45: #{tgsa_forward.1} parent=23 // pred_check
          %p322 = pneg %p208
        $region46: #{tgsa_forward.1} parent=23 // pred_check_branch
          %324 = sbr.rel (%p322) target = $region48
        $region47: #{tgsa_forward.1} parent=23 // pred_region
          %p325 = scmp.lt.s32.totalorder %s16, 1
          %s326 = scalar_select %p325, %s16, 1
          %s327 = scalar_lea.vmem %s7, %s326
        $region48: #{tgsa_forward.1} parent=23 // pred_fallthru
          _
        // Predicated region
        $region49: #{tgsa_forward.1} parent=23 // pred_check
          %p328 = pneg %p234
        $region50: #{tgsa_forward.1} parent=23 // pred_check_branch
          %330 = sbr.rel (%p328) target = $region52
        $region51: #{tgsa_forward.1} parent=23 // pred_region
          %p331 = scmp.lt.s32.totalorder %s16, 1
          %s332 = scalar_select %p331, %s16, 1
          %s333 = smul.addr %s332, 8
          %s334 = scalar_lea.vmem %s8, %s333
        $region52: #{tgsa_forward.1} parent=23 // pred_fallthru
          _
      $region24: #{tgsa_forward.1} parent=5 // pred_fallthru
        _
      %p335 = scmp.le.s32.totalorder 1, %s16
      %p336 = scmp.lt.s32.totalorder %s16, 3
      %p337 = pnand %p335, %p336
      %p338 = pneg %p337
      // Predicated region
      $region53: #{tgsa_forward.1} parent=5 // pred_check
        _
      $region54: #{tgsa_forward.1} parent=5 // pred_check_branch
        %340 = sbr.rel (%p337) target = $region56
      $region55: #{tgsa_forward.1} parent=5 // pred_region
        %s341 = ssub.s32 %s16, 1
        %p342 = pneg %p37
        %p343 = pneg %p34
        %p344 = pneg %p58
        %p345 = pneg %p55
        %p346 = scmp.lt.s32.totalorder %s21, 1
        %s347 = scalar_select %p346, %s21, 1
        %s348 = smul.addr %s347, 4
        %s349 = smul.addr %s348, 4
        %s350 = scalar_lea.vmem %s2, %s349
        %p351 = pneg %p84
        %p352 = pneg %p81
        %p353 = scmp.lt.s32.totalorder %s21, 1
        %s354 = scalar_select %p353, %s21, 1
        %s355 = scalar_lea.vmem %s3, %s354
        %p356 = pneg %p110
        %p357 = pneg %p107
        %p358 = scmp.lt.s32.totalorder %s21, 1
        %s359 = scalar_select %p358, %s21, 1
        %s360 = smul.addr %s359, 4
        %s361 = smul.addr %s360, 4
        %s362 = scalar_lea.vmem %s4, %s361
        %p363 = pneg %p136
        %p364 = pneg %p133
        %p365 = scmp.lt.s32.totalorder %s21, 1
        %s366 = scalar_select %p365, %s21, 1
        %s367 = scalar_lea.vmem %s5, %s366
        %p368 = pneg %p162
        %p369 = pneg %p159
        %p370 = scmp.lt.s32.totalorder %s21, 1
        %s371 = scalar_select %p370, %s21, 1
        %s372 = smul.addr %s371, 4
        %s373 = smul.addr %s372, 4
        %s374 = scalar_lea.vmem %s6, %s373
        %p375 = pneg %p188
        %p376 = pneg %p185
        %p377 = scmp.lt.s32.totalorder %s21, 1
        %s378 = scalar_select %p377, %s21, 1
        %s379 = scalar_lea.vmem %s7, %s378
        %p380 = pneg %p214
        %p381 = pneg %p211
        %p382 = scmp.lt.s32.totalorder %s21, 1
        %s383 = scalar_select %p382, %s21, 1
        %s384 = smul.addr %s383, 8
        %s385 = scalar_lea.vmem %s8, %s384
        %p386 = pneg %p240
        %p387 = pneg %p237
        %p388 = pneg %p261
        %p389 = pneg %p258
        %p390 = scmp.lt.s32.totalorder %s21, 1
        %s391 = scalar_select %p390, %s21, 1
        %s392 = smul.addr %s391, 4
        %s393 = smul.addr %s392, 4
        %s394 = scalar_lea.vmem %s2, %s393
        %p395 = scmp.lt.s32.totalorder %s21, 1
        %s396 = scalar_select %p395, %s21, 1
        %s397 = scalar_lea.vmem %s3, %s396
        %p398 = scmp.lt.s32.totalorder %s21, 1
        %s399 = scalar_select %p398, %s21, 1
        %s400 = smul.addr %s399, 4
        %s401 = smul.addr %s400, 4
        %s402 = scalar_lea.vmem %s4, %s401
        %p403 = scmp.lt.s32.totalorder %s21, 1
        %s404 = scalar_select %p403, %s21, 1
        %s405 = scalar_lea.vmem %s5, %s404
        %p406 = scmp.lt.s32.totalorder %s21, 1
        %s407 = scalar_select %p406, %s21, 1
        %s408 = smul.addr %s407, 4
        %s409 = smul.addr %s408, 4
        %s410 = scalar_lea.vmem %s6, %s409
        %p411 = scmp.lt.s32.totalorder %s21, 1
        %s412 = scalar_select %p411, %s21, 1
        %s413 = scalar_lea.vmem %s7, %s412
        %p414 = scmp.lt.s32.totalorder %s21, 1
        %s415 = scalar_select %p414, %s21, 1
        %s416 = smul.addr %s415, 8
        %s417 = scalar_lea.vmem %s8, %s416
        %p419 = scmp.eq.s32.totalorder %s21, 0
        // Predicated region
        $region57: #{tgsa_forward.1} parent=55 // pred_check
          %p420 = pneg %p419
        $region58: #{tgsa_forward.1} parent=55 // pred_check_branch
          %422 = sbr.rel (%p420) target = $region60
        $region59: #{tgsa_forward.1} parent=55 // pred_region
          %v423 = vld [vmem:[%s0] sm:$0xff]
          %v424 = vld [vmem:[%s0 + $0x8] sm:$0xff]
          %vm425 = vcmask 261120
          %426 = vst.msk [vmem:[#allocation2] sm:$0xff] %vm425, %v423
          %427 = vst.msk [vmem:[#allocation2 + $0x8] sm:$0xff] %vm425, %v424
        $region60: #{tgsa_forward.1} parent=55 // pred_fallthru
          _
        %v428 = vld [vmem:[#allocation2] sm:$0xff]
        %v429 = vld [vmem:[#allocation2 + $0x8] sm:$0xff]
        %v430 = vpack.c.bf16 %v429, %v428
        %v431 = vld [vmem:[%s394] sm:$0xf]
        %v432 = vld [vmem:[%s394 + $0x4] sm:$0xf]
        %v433 = vld [vmem:[%s394 + $0x8] sm:$0xf]
        %v434 = vld [vmem:[%s394 + $0xc] sm:$0xf]
        %v435 = vld [vmem:[%s397] sm:$0x1]
        %v437 = vperm.slane %v435, 0
        %v443 = vunpack.c.l.b16 %v431
        %v444 = vunpack.c.l.b16 %v432
        %v445 = vunpack.c.l.b16 %v433
        %v446 = vunpack.c.l.b16 %v434
        %v447 = vpack.c.b16 %v444, %v443
        %v448 = vpack.c.b16 %v446, %v445
        %vm451 = vcmask 261120
        %v453 = vsel %vm451, %v430, 0
        %455 = vmatpush.bf16.msra.mxu0 0
        %456 = vmatpush.bf16.msra.mxu0 0
        %457 = vmatpush.bf16.msra.mxu0 0
        %458 = vmatpush.bf16.msra.mxu0 0
        %459 = vmatpush.bf16.msra.mxu0 0
        %460 = vmatpush.bf16.msra.mxu0 0
        %461 = vmatpush.bf16.msra.mxu0 %v448
        %462 = vmatpush.bf16.msra.mxu0 %v447
        %463 = vmatmul.bf16.gmra.mxu0 %v453
        %v464 = vpop.f32.mrf.mxu0
        %v465 = vadd.f32 %v437, %v464
        %v466 = vpop.f32.mrf.mxu0
        %v467 = vadd.f32 %v437, %v466
        %468 = vdwg.mxu0
        %469 = vxpose.xlu0.b32.start [1/16] %v465, 128
        %470 = vxpose.xlu0.b32.cont [2/16] 0.0, 128
        %471 = vxpose.xlu0.b32.cont [3/16] 0.0, 128
        %472 = vxpose.xlu0.b32.cont [4/16] 0.0, 128
        %473 = vxpose.xlu0.b32.cont [5/16] 0.0, 128
        %474 = vxpose.xlu0.b32.cont [6/16] 0.0, 128
        %475 = vxpose.xlu0.b32.cont [7/16] 0.0, 128
        %476 = vxpose.xlu0.b32.cont [8/16] 0.0, 128
        %477 = vxpose.xlu0.b32.cont [9/16] 0.0, 128
        %478 = vxpose.xlu0.b32.cont [10/16] 0.0, 128
        %479 = vxpose.xlu0.b32.cont [11/16] 0.0, 128
        %480 = vxpose.xlu0.b32.cont [12/16] 0.0, 128
        %481 = vxpose.xlu0.b32.cont [13/16] 0.0, 128
        %482 = vxpose.xlu0.b32.cont [14/16] 0.0, 128
        %483 = vxpose.xlu0.b32.cont [15/16] 0.0, 128
        %484 = vxpose.xlu0.b32.end [16/16] 0.0, 128
        %v485 = vpop.trf.xlu0
        %v486 = vpop.trf.xlu0
        %v487 = vpop.trf.xlu0
        %v488 = vpop.trf.xlu0
        %v489 = vpop.trf.xlu0
        %v490 = vpop.trf.xlu0
        %v491 = vpop.trf.xlu0
        %v492 = vpop.trf.xlu0
        %v493 = vpop.trf.xlu0
        %v494 = vpop.trf.xlu0
        %v495 = vpop.trf.xlu0
        %v496 = vpop.trf.xlu0
        %v497 = vpop.trf.xlu0
        %v498 = vpop.trf.xlu0
        %v499 = vpop.trf.xlu0
        %v500 = vpop.trf.xlu0
        %501 = vxpose.xlu0.b32.start [1/16] %v467, 128
        %502 = vxpose.xlu0.b32.cont [2/16] 0.0, 128
        %503 = vxpose.xlu0.b32.cont [3/16] 0.0, 128
        %504 = vxpose.xlu0.b32.cont [4/16] 0.0, 128
        %505 = vxpose.xlu0.b32.cont [5/16] 0.0, 128
        %506 = vxpose.xlu0.b32.cont [6/16] 0.0, 128
        %507 = vxpose.xlu0.b32.cont [7/16] 0.0, 128
        %508 = vxpose.xlu0.b32.cont [8/16] 0.0, 128
        %509 = vxpose.xlu0.b32.cont [9/16] 0.0, 128
        %510 = vxpose.xlu0.b32.cont [10/16] 0.0, 128
        %511 = vxpose.xlu0.b32.cont [11/16] 0.0, 128
        %512 = vxpose.xlu0.b32.cont [12/16] 0.0, 128
        %513 = vxpose.xlu0.b32.cont [13/16] 0.0, 128
        %514 = vxpose.xlu0.b32.cont [14/16] 0.0, 128
        %515 = vxpose.xlu0.b32.cont [15/16] 0.0, 128
        %516 = vxpose.xlu0.b32.end [16/16] 0.0, 128
        %v517 = vpop.trf.xlu0
        %v518 = vpop.trf.xlu0
        %v519 = vpop.trf.xlu0
        %v520 = vpop.trf.xlu0
        %v521 = vpop.trf.xlu0
        %v522 = vpop.trf.xlu0
        %v523 = vpop.trf.xlu0
        %v524 = vpop.trf.xlu0
        %v525 = vpop.trf.xlu0
        %v526 = vpop.trf.xlu0
        %v527 = vpop.trf.xlu0
        %v528 = vpop.trf.xlu0
        %v529 = vpop.trf.xlu0
        %v530 = vpop.trf.xlu0
        %v531 = vpop.trf.xlu0
        %v532 = vpop.trf.xlu0
        %v533 = vld [vmem:[%s1] sm:$0xff]
        %v534 = vld [vmem:[%s1 + $0x8] sm:$0xff]
        %v535 = vld [vmem:[%s1 + $0x10] sm:$0xff]
        %v536 = vld [vmem:[%s1 + $0x18] sm:$0xff]
        %v537 = vld [vmem:[%s1 + $0x20] sm:$0xff]
        %v538 = vld [vmem:[%s1 + $0x28] sm:$0xff]
        %v539 = vld [vmem:[%s1 + $0x30] sm:$0xff]
        %v540 = vld [vmem:[%s1 + $0x38] sm:$0xff]
        %v541 = vmul.f32 %v485, %v533
        %v542 = vmul.f32 %v486, %v534
        %v543 = vmul.f32 %v487, %v535
        %v544 = vmul.f32 %v488, %v536
        %v545 = vmul.f32 %v517, %v537
        %v546 = vmul.f32 %v518, %v538
        %v547 = vmul.f32 %v519, %v539
        %v548 = vmul.f32 %v520, %v540
        %v549 = vmul.f32 %v489, %v533
        %v550 = vmul.f32 %v490, %v534
        %v551 = vmul.f32 %v491, %v535
        %v552 = vmul.f32 %v492, %v536
        %v553 = vmul.f32 %v521, %v537
        %v554 = vmul.f32 %v522, %v538
        %v555 = vmul.f32 %v523, %v539
        %v556 = vmul.f32 %v524, %v540
        %vm557 = vcmask 64512
        %v559 = vsel %vm557, %v541, 0
        %v562 = vsel %vm557, %v549, 0
        %564 = vmatpush.xpose.msra.mxu0 0.0
        %565 = vmatpush.xpose.msra.mxu0 0.0
        %566 = vmatpush.xpose.msra.mxu0 0.0
        %567 = vmatpush.xpose.msra.mxu0 0.0
        %568 = vmatpush.xpose.msra.mxu0 0.0
        %569 = vmatpush.xpose.msra.mxu0 0.0
        %570 = vmatpush.xpose.msra.mxu0 0.0
        %571 = vmatpush.xpose.msra.mxu0 0.0
        %572 = vmatpush.xpose.msra.mxu0 0.0
        %573 = vmatpush.xpose.msra.mxu0 0.0
        %574 = vmatpush.xpose.msra.mxu0 0.0
        %575 = vmatpush.xpose.msra.mxu0 0.0
        %576 = vmatpush.xpose.msra.mxu0 0.0
        %577 = vmatpush.xpose.msra.mxu0 0.0
        %578 = vmatpush.xpose.msra.mxu0 0.0
        %579 = vmatpush.xpose.msra.mxu0 %v562
        %580 = vmatmul.f32.gmra.mxu0 %v559
        %v581 = vpop.f32.mrf.mxu0
        %v582 = vadd.f32 0.0, %v581
        %583 = vdwg.mxu0
        %v585 = vsel %vm557, %v542, 0
        %v588 = vsel %vm557, %v550, 0
        %590 = vmatpush.xpose.msra.mxu0 0.0
        %591 = vmatpush.xpose.msra.mxu0 0.0
        %592 = vmatpush.xpose.msra.mxu0 0.0
        %593 = vmatpush.xpose.msra.mxu0 0.0
        %594 = vmatpush.xpose.msra.mxu0 0.0
        %595 = vmatpush.xpose.msra.mxu0 0.0
        %596 = vmatpush.xpose.msra.mxu0 0.0
        %597 = vmatpush.xpose.msra.mxu0 0.0
        %598 = vmatpush.xpose.msra.mxu0 0.0
        %599 = vmatpush.xpose.msra.mxu0 0.0
        %600 = vmatpush.xpose.msra.mxu0 0.0
        %601 = vmatpush.xpose.msra.mxu0 0.0
        %602 = vmatpush.xpose.msra.mxu0 0.0
        %603 = vmatpush.xpose.msra.mxu0 0.0
        %604 = vmatpush.xpose.msra.mxu0 0.0
        %605 = vmatpush.xpose.msra.mxu0 %v588
        %606 = vmatmul.f32.gmra.mxu0 %v585
        %v607 = vpop.f32.mrf.mxu0
        %v608 = vadd.f32 0.0, %v607
        %609 = vdwg.mxu0
        %v611 = vsel %vm557, %v543, 0
        %v614 = vsel %vm557, %v551, 0
        %616 = vmatpush.xpose.msra.mxu0 0.0
        %617 = vmatpush.xpose.msra.mxu0 0.0
        %618 = vmatpush.xpose.msra.mxu0 0.0
        %619 = vmatpush.xpose.msra.mxu0 0.0
        %620 = vmatpush.xpose.msra.mxu0 0.0
        %621 = vmatpush.xpose.msra.mxu0 0.0
        %622 = vmatpush.xpose.msra.mxu0 0.0
        %623 = vmatpush.xpose.msra.mxu0 0.0
        %624 = vmatpush.xpose.msra.mxu0 0.0
        %625 = vmatpush.xpose.msra.mxu0 0.0
        %626 = vmatpush.xpose.msra.mxu0 0.0
        %627 = vmatpush.xpose.msra.mxu0 0.0
        %628 = vmatpush.xpose.msra.mxu0 0.0
        %629 = vmatpush.xpose.msra.mxu0 0.0
        %630 = vmatpush.xpose.msra.mxu0 0.0
        %631 = vmatpush.xpose.msra.mxu0 %v614
        %632 = vmatmul.f32.gmra.mxu0 %v611
        %v633 = vpop.f32.mrf.mxu0
        %v634 = vadd.f32 0.0, %v633
        %635 = vdwg.mxu0
        %v637 = vsel %vm557, %v544, 0
        %v640 = vsel %vm557, %v552, 0
        %642 = vmatpush.xpose.msra.mxu0 0.0
        %643 = vmatpush.xpose.msra.mxu0 0.0
        %644 = vmatpush.xpose.msra.mxu0 0.0
        %645 = vmatpush.xpose.msra.mxu0 0.0
        %646 = vmatpush.xpose.msra.mxu0 0.0
        %647 = vmatpush.xpose.msra.mxu0 0.0
        %648 = vmatpush.xpose.msra.mxu0 0.0
        %649 = vmatpush.xpose.msra.mxu0 0.0
        %650 = vmatpush.xpose.msra.mxu0 0.0
        %651 = vmatpush.xpose.msra.mxu0 0.0
        %652 = vmatpush.xpose.msra.mxu0 0.0
        %653 = vmatpush.xpose.msra.mxu0 0.0
        %654 = vmatpush.xpose.msra.mxu0 0.0
        %655 = vmatpush.xpose.msra.mxu0 0.0
        %656 = vmatpush.xpose.msra.mxu0 0.0
        %657 = vmatpush.xpose.msra.mxu0 %v640
        %658 = vmatmul.f32.gmra.mxu0 %v637
        %v659 = vpop.f32.mrf.mxu0
        %v660 = vadd.f32 0.0, %v659
        %661 = vdwg.mxu0
        %v663 = vsel %vm557, %v545, 0
        %v666 = vsel %vm557, %v553, 0
        %668 = vmatpush.xpose.msra.mxu0 0.0
        %669 = vmatpush.xpose.msra.mxu0 0.0
        %670 = vmatpush.xpose.msra.mxu0 0.0
        %671 = vmatpush.xpose.msra.mxu0 0.0
        %672 = vmatpush.xpose.msra.mxu0 0.0
        %673 = vmatpush.xpose.msra.mxu0 0.0
        %674 = vmatpush.xpose.msra.mxu0 0.0
        %675 = vmatpush.xpose.msra.mxu0 0.0
        %676 = vmatpush.xpose.msra.mxu0 0.0
        %677 = vmatpush.xpose.msra.mxu0 0.0
        %678 = vmatpush.xpose.msra.mxu0 0.0
        %679 = vmatpush.xpose.msra.mxu0 0.0
        %680 = vmatpush.xpose.msra.mxu0 0.0
        %681 = vmatpush.xpose.msra.mxu0 0.0
        %682 = vmatpush.xpose.msra.mxu0 0.0
        %683 = vmatpush.xpose.msra.mxu0 %v666
        %684 = vmatmul.f32.gmra.mxu0 %v663
        %v685 = vpop.f32.mrf.mxu0
        %v686 = vadd.f32 0.0, %v685
        %687 = vdwg.mxu0
        %v689 = vsel %vm557, %v546, 0
        %v692 = vsel %vm557, %v554, 0
        %694 = vmatpush.xpose.msra.mxu0 0.0
        %695 = vmatpush.xpose.msra.mxu0 0.0
        %696 = vmatpush.xpose.msra.mxu0 0.0
        %697 = vmatpush.xpose.msra.mxu0 0.0
        %698 = vmatpush.xpose.msra.mxu0 0.0
        %699 = vmatpush.xpose.msra.mxu0 0.0
        %700 = vmatpush.xpose.msra.mxu0 0.0
        %701 = vmatpush.xpose.msra.mxu0 0.0
        %702 = vmatpush.xpose.msra.mxu0 0.0
        %703 = vmatpush.xpose.msra.mxu0 0.0
        %704 = vmatpush.xpose.msra.mxu0 0.0
        %705 = vmatpush.xpose.msra.mxu0 0.0
        %706 = vmatpush.xpose.msra.mxu0 0.0
        %707 = vmatpush.xpose.msra.mxu0 0.0
        %708 = vmatpush.xpose.msra.mxu0 0.0
        %709 = vmatpush.xpose.msra.mxu0 %v692
        %710 = vmatmul.f32.gmra.mxu0 %v689
        %v711 = vpop.f32.mrf.mxu0
        %v712 = vadd.f32 0.0, %v711
        %713 = vdwg.mxu0
        %v715 = vsel %vm557, %v547, 0
        %v718 = vsel %vm557, %v555, 0
        %720 = vmatpush.xpose.msra.mxu0 0.0
        %721 = vmatpush.xpose.msra.mxu0 0.0
        %722 = vmatpush.xpose.msra.mxu0 0.0
        %723 = vmatpush.xpose.msra.mxu0 0.0
        %724 = vmatpush.xpose.msra.mxu0 0.0
        %725 = vmatpush.xpose.msra.mxu0 0.0
        %726 = vmatpush.xpose.msra.mxu0 0.0
        %727 = vmatpush.xpose.msra.mxu0 0.0
        %728 = vmatpush.xpose.msra.mxu0 0.0
        %729 = vmatpush.xpose.msra.mxu0 0.0
        %730 = vmatpush.xpose.msra.mxu0 0.0
        %731 = vmatpush.xpose.msra.mxu0 0.0
        %732 = vmatpush.xpose.msra.mxu0 0.0
        %733 = vmatpush.xpose.msra.mxu0 0.0
        %734 = vmatpush.xpose.msra.mxu0 0.0
        %735 = vmatpush.xpose.msra.mxu0 %v718
        %736 = vmatmul.f32.gmra.mxu0 %v715
        %v737 = vpop.f32.mrf.mxu0
        %v738 = vadd.f32 0.0, %v737
        %739 = vdwg.mxu0
        %v741 = vsel %vm557, %v548, 0
        %v744 = vsel %vm557, %v556, 0
        %746 = vmatpush.xpose.msra.mxu0 0.0
        %747 = vmatpush.xpose.msra.mxu0 0.0
        %748 = vmatpush.xpose.msra.mxu0 0.0
        %749 = vmatpush.xpose.msra.mxu0 0.0
        %750 = vmatpush.xpose.msra.mxu0 0.0
        %751 = vmatpush.xpose.msra.mxu0 0.0
        %752 = vmatpush.xpose.msra.mxu0 0.0
        %753 = vmatpush.xpose.msra.mxu0 0.0
        %754 = vmatpush.xpose.msra.mxu0 0.0
        %755 = vmatpush.xpose.msra.mxu0 0.0
        %756 = vmatpush.xpose.msra.mxu0 0.0
        %757 = vmatpush.xpose.msra.mxu0 0.0
        %758 = vmatpush.xpose.msra.mxu0 0.0
        %759 = vmatpush.xpose.msra.mxu0 0.0
        %760 = vmatpush.xpose.msra.mxu0 0.0
        %761 = vmatpush.xpose.msra.mxu0 %v744
        %762 = vmatmul.f32.gmra.mxu0 %v741
        %v763 = vpop.f32.mrf.mxu0
        %v764 = vadd.f32 0.0, %v763
        %765 = vdwg.mxu0
        %v766 = vmul.f32 %v582, 0.35355338
        %v767 = vmul.f32 %v608, 0.35355338
        %v768 = vmul.f32 %v634, 0.35355338
        %v769 = vmul.f32 %v660, 0.35355338
        %v770 = vmul.f32 %v686, 0.35355338
        %v771 = vmul.f32 %v712, 0.35355338
        %v772 = vmul.f32 %v738, 0.35355338
        %v773 = vmul.f32 %v764, 0.35355338
        %v774 = vld [vmem:[%s417] sm:$0xff]
        %v775 = vmul.f32 %v766, %v774
        %v776 = vmul.f32 %v767, %v774
        %v777 = vmul.f32 %v768, %v774
        %v778 = vmul.f32 %v769, %v774
        %v779 = vmul.f32 %v770, %v774
        %v780 = vmul.f32 %v771, %v774
        %v781 = vmul.f32 %v772, %v774
        %v782 = vmul.f32 %v773, %v774
        %vm783 = vcmp.eq.f32.partialorder %v775, 0.0
        %vm784 = vcmp.eq.f32.partialorder %v776, 0.0
        %vm785 = vcmp.eq.f32.partialorder %v777, 0.0
        %vm786 = vcmp.eq.f32.partialorder %v778, 0.0
        %vm787 = vcmp.eq.f32.partialorder %v779, 0.0
        %vm788 = vcmp.eq.f32.partialorder %v780, 0.0
        %vm789 = vcmp.eq.f32.partialorder %v781, 0.0
        %vm790 = vcmp.eq.f32.partialorder %v782, 0.0
        %v791 = vsel %vm783, -2e+20, %v775
        %v792 = vsel %vm784, -2e+20, %v776
        %v793 = vsel %vm785, -2e+20, %v777
        %v794 = vsel %vm786, -2e+20, %v778
        %v795 = vsel %vm787, -2e+20, %v779
        %v796 = vsel %vm788, -2e+20, %v780
        %v797 = vsel %vm789, -2e+20, %v781
        %v798 = vsel %vm790, -2e+20, %v782
        %v799 = vsel %vm557, %v791, -inf
        %800 = vmax.xlane.f32.xlu0 %v799
        %v801 = vpop.xlane.xlu0 %800
        %v802 = vsel %vm557, %v792, -inf
        %803 = vmax.xlane.f32.xlu0 %v802
        %v804 = vpop.xlane.xlu0 %803
        %v805 = vsel %vm557, %v793, -inf
        %806 = vmax.xlane.f32.xlu0 %v805
        %v807 = vpop.xlane.xlu0 %806
        %v808 = vsel %vm557, %v794, -inf
        %809 = vmax.xlane.f32.xlu0 %v808
        %v810 = vpop.xlane.xlu0 %809
        %v811 = vsel %vm557, %v795, -inf
        %812 = vmax.xlane.f32.xlu0 %v811
        %v813 = vpop.xlane.xlu0 %812
        %v814 = vsel %vm557, %v796, -inf
        %815 = vmax.xlane.f32.xlu0 %v814
        %v816 = vpop.xlane.xlu0 %815
        %v817 = vsel %vm557, %v797, -inf
        %818 = vmax.xlane.f32.xlu0 %v817
        %v819 = vpop.xlane.xlu0 %818
        %v820 = vsel %vm557, %v798, -inf
        %821 = vmax.xlane.f32.xlu0 %v820
        %v822 = vpop.xlane.xlu0 %821
        %v823 = vsub.f32 %v791, %v801
        %v824 = vsub.f32 %v792, %v804
        %v825 = vsub.f32 %v793, %v807
        %v826 = vsub.f32 %v794, %v810
        %v827 = vsub.f32 %v795, %v813
        %v828 = vsub.f32 %v796, %v816
        %v829 = vsub.f32 %v797, %v819
        %v830 = vsub.f32 %v798, %v822
        %v831 = vmul.f32 %v823, 1.442695
        %v832 = vpow.pop %v831
        %v833 = vmul.f32 %v824, 1.442695
        %v834 = vpow.pop %v833
        %v835 = vmul.f32 %v825, 1.442695
        %v836 = vpow.pop %v835
        %v837 = vmul.f32 %v826, 1.442695
        %v838 = vpow.pop %v837
        %v839 = vmul.f32 %v827, 1.442695
        %v840 = vpow.pop %v839
        %v841 = vmul.f32 %v828, 1.442695
        %v842 = vpow.pop %v841
        %v843 = vmul.f32 %v829, 1.442695
        %v844 = vpow.pop %v843
        %v845 = vmul.f32 %v830, 1.442695
        %v846 = vpow.pop %v845
        %v847 = vsel %vm557, %v832, 0.0
        %848 = vadd.xlane.f32.xlu0 %v847
        %v849 = vpop.xlane.xlu0 %848
        %v850 = vsel %vm557, %v834, 0.0
        %851 = vadd.xlane.f32.xlu0 %v850
        %v852 = vpop.xlane.xlu0 %851
        %v853 = vsel %vm557, %v836, 0.0
        %854 = vadd.xlane.f32.xlu0 %v853
        %v855 = vpop.xlane.xlu0 %854
        %v856 = vsel %vm557, %v838, 0.0
        %857 = vadd.xlane.f32.xlu0 %v856
        %v858 = vpop.xlane.xlu0 %857
        %v859 = vsel %vm557, %v840, 0.0
        %860 = vadd.xlane.f32.xlu0 %v859
        %v861 = vpop.xlane.xlu0 %860
        %v862 = vsel %vm557, %v842, 0.0
        %863 = vadd.xlane.f32.xlu0 %v862
        %v864 = vpop.xlane.xlu0 %863
        %v865 = vsel %vm557, %v844, 0.0
        %866 = vadd.xlane.f32.xlu0 %v865
        %v867 = vpop.xlane.xlu0 %866
        %v868 = vsel %vm557, %v846, 0.0
        %869 = vadd.xlane.f32.xlu0 %v868
        %v870 = vpop.xlane.xlu0 %869
        %v871 = vrcp.pop %v849
        %v872 = vrcp.pop %v852
        %v873 = vrcp.pop %v855
        %v874 = vrcp.pop %v858
        %v875 = vrcp.pop %v861
        %v876 = vrcp.pop %v864
        %v877 = vrcp.pop %v867
        %v878 = vrcp.pop %v870
        %v879 = vmul.f32 %v832, %v871
        %v880 = vmul.f32 %v834, %v872
        %v881 = vmul.f32 %v836, %v873
        %v882 = vmul.f32 %v838, %v874
        %v883 = vmul.f32 %v840, %v875
        %v884 = vmul.f32 %v842, %v876
        %v885 = vmul.f32 %v844, %v877
        %v886 = vmul.f32 %v846, %v878
        %v888 = vsel %vm557, %v879, 0
        %890 = vmatpush.msra.mxu0 0.0
        %891 = vmatpush.msra.mxu0 0.0
        %892 = vmatpush.msra.mxu0 0.0
        %893 = vmatpush.msra.mxu0 0.0
        %894 = vmatpush.msra.mxu0 0.0
        %895 = vmatpush.msra.mxu0 0.0
        %896 = vmatpush.msra.mxu0 0.0
        %897 = vmatpush.msra.mxu0 0.0
        %898 = vmatpush.msra.mxu0 0.0
        %899 = vmatpush.msra.mxu0 0.0
        %900 = vmatpush.msra.mxu0 0.0
        %901 = vmatpush.msra.mxu0 0.0
        %902 = vmatpush.msra.mxu0 0.0
        %903 = vmatpush.msra.mxu0 0.0
        %904 = vmatpush.msra.mxu0 0.0
        %905 = vmatpush.msra.mxu0 %v493
        %906 = vmatmul.f32.gmra.mxu0 %v888
        %v907 = vpop.f32.mrf.mxu0
        %v908 = vadd.f32 0.0, %v907
        %909 = vdwg.mxu0
        %v911 = vsel %vm557, %v880, 0
        %913 = vmatpush.msra.mxu0 0.0
        %914 = vmatpush.msra.mxu0 0.0
        %915 = vmatpush.msra.mxu0 0.0
        %916 = vmatpush.msra.mxu0 0.0
        %917 = vmatpush.msra.mxu0 0.0
        %918 = vmatpush.msra.mxu0 0.0
        %919 = vmatpush.msra.mxu0 0.0
        %920 = vmatpush.msra.mxu0 0.0
        %921 = vmatpush.msra.mxu0 0.0
        %922 = vmatpush.msra.mxu0 0.0
        %923 = vmatpush.msra.mxu0 0.0
        %924 = vmatpush.msra.mxu0 0.0
        %925 = vmatpush.msra.mxu0 0.0
        %926 = vmatpush.msra.mxu0 0.0
        %927 = vmatpush.msra.mxu0 0.0
        %928 = vmatpush.msra.mxu0 %v494
        %929 = vmatmul.f32.gmra.mxu0 %v911
        %v930 = vpop.f32.mrf.mxu0
        %v931 = vadd.f32 0.0, %v930
        %932 = vdwg.mxu0
        %v934 = vsel %vm557, %v881, 0
        %936 = vmatpush.msra.mxu0 0.0
        %937 = vmatpush.msra.mxu0 0.0
        %938 = vmatpush.msra.mxu0 0.0
        %939 = vmatpush.msra.mxu0 0.0
        %940 = vmatpush.msra.mxu0 0.0
        %941 = vmatpush.msra.mxu0 0.0
        %942 = vmatpush.msra.mxu0 0.0
        %943 = vmatpush.msra.mxu0 0.0
        %944 = vmatpush.msra.mxu0 0.0
        %945 = vmatpush.msra.mxu0 0.0
        %946 = vmatpush.msra.mxu0 0.0
        %947 = vmatpush.msra.mxu0 0.0
        %948 = vmatpush.msra.mxu0 0.0
        %949 = vmatpush.msra.mxu0 0.0
        %950 = vmatpush.msra.mxu0 0.0
        %951 = vmatpush.msra.mxu0 %v495
        %952 = vmatmul.f32.gmra.mxu0 %v934
        %v953 = vpop.f32.mrf.mxu0
        %v954 = vadd.f32 0.0, %v953
        %955 = vdwg.mxu0
        %v957 = vsel %vm557, %v882, 0
        %959 = vmatpush.msra.mxu0 0.0
        %960 = vmatpush.msra.mxu0 0.0
        %961 = vmatpush.msra.mxu0 0.0
        %962 = vmatpush.msra.mxu0 0.0
        %963 = vmatpush.msra.mxu0 0.0
        %964 = vmatpush.msra.mxu0 0.0
        %965 = vmatpush.msra.mxu0 0.0
        %966 = vmatpush.msra.mxu0 0.0
        %967 = vmatpush.msra.mxu0 0.0
        %968 = vmatpush.msra.mxu0 0.0
        %969 = vmatpush.msra.mxu0 0.0
        %970 = vmatpush.msra.mxu0 0.0
        %971 = vmatpush.msra.mxu0 0.0
        %972 = vmatpush.msra.mxu0 0.0
        %973 = vmatpush.msra.mxu0 0.0
        %974 = vmatpush.msra.mxu0 %v496
        %975 = vmatmul.f32.gmra.mxu0 %v957
        %v976 = vpop.f32.mrf.mxu0
        %v977 = vadd.f32 0.0, %v976
        %978 = vdwg.mxu0
        %v980 = vsel %vm557, %v883, 0
        %982 = vmatpush.msra.mxu0 0.0
        %983 = vmatpush.msra.mxu0 0.0
        %984 = vmatpush.msra.mxu0 0.0
        %985 = vmatpush.msra.mxu0 0.0
        %986 = vmatpush.msra.mxu0 0.0
        %987 = vmatpush.msra.mxu0 0.0
        %988 = vmatpush.msra.mxu0 0.0
        %989 = vmatpush.msra.mxu0 0.0
        %990 = vmatpush.msra.mxu0 0.0
        %991 = vmatpush.msra.mxu0 0.0
        %992 = vmatpush.msra.mxu0 0.0
        %993 = vmatpush.msra.mxu0 0.0
        %994 = vmatpush.msra.mxu0 0.0
        %995 = vmatpush.msra.mxu0 0.0
        %996 = vmatpush.msra.mxu0 0.0
        %997 = vmatpush.msra.mxu0 %v525
        %998 = vmatmul.f32.gmra.mxu0 %v980
        %v999 = vpop.f32.mrf.mxu0
        %v1000 = vadd.f32 0.0, %v999
        %1001 = vdwg.mxu0
        %v1003 = vsel %vm557, %v884, 0
        %1005 = vmatpush.msra.mxu0 0.0
        %1006 = vmatpush.msra.mxu0 0.0
        %1007 = vmatpush.msra.mxu0 0.0
        %1008 = vmatpush.msra.mxu0 0.0
        %1009 = vmatpush.msra.mxu0 0.0
        %1010 = vmatpush.msra.mxu0 0.0
        %1011 = vmatpush.msra.mxu0 0.0
        %1012 = vmatpush.msra.mxu0 0.0
        %1013 = vmatpush.msra.mxu0 0.0
        %1014 = vmatpush.msra.mxu0 0.0
        %1015 = vmatpush.msra.mxu0 0.0
        %1016 = vmatpush.msra.mxu0 0.0
        %1017 = vmatpush.msra.mxu0 0.0
        %1018 = vmatpush.msra.mxu0 0.0
        %1019 = vmatpush.msra.mxu0 0.0
        %1020 = vmatpush.msra.mxu0 %v526
        %1021 = vmatmul.f32.gmra.mxu0 %v1003
        %v1022 = vpop.f32.mrf.mxu0
        %v1023 = vadd.f32 0.0, %v1022
        %1024 = vdwg.mxu0
        %v1026 = vsel %vm557, %v885, 0
        %1028 = vmatpush.msra.mxu0 0.0
        %1029 = vmatpush.msra.mxu0 0.0
        %1030 = vmatpush.msra.mxu0 0.0
        %1031 = vmatpush.msra.mxu0 0.0
        %1032 = vmatpush.msra.mxu0 0.0
        %1033 = vmatpush.msra.mxu0 0.0
        %1034 = vmatpush.msra.mxu0 0.0
        %1035 = vmatpush.msra.mxu0 0.0
        %1036 = vmatpush.msra.mxu0 0.0
        %1037 = vmatpush.msra.mxu0 0.0
        %1038 = vmatpush.msra.mxu0 0.0
        %1039 = vmatpush.msra.mxu0 0.0
        %1040 = vmatpush.msra.mxu0 0.0
        %1041 = vmatpush.msra.mxu0 0.0
        %1042 = vmatpush.msra.mxu0 0.0
        %1043 = vmatpush.msra.mxu0 %v527
        %1044 = vmatmul.f32.gmra.mxu0 %v1026
        %v1045 = vpop.f32.mrf.mxu0
        %v1046 = vadd.f32 0.0, %v1045
        %1047 = vdwg.mxu0
        %v1049 = vsel %vm557, %v886, 0
        %1051 = vmatpush.msra.mxu0 0.0
        %1052 = vmatpush.msra.mxu0 0.0
        %1053 = vmatpush.msra.mxu0 0.0
        %1054 = vmatpush.msra.mxu0 0.0
        %1055 = vmatpush.msra.mxu0 0.0
        %1056 = vmatpush.msra.mxu0 0.0
        %1057 = vmatpush.msra.mxu0 0.0
        %1058 = vmatpush.msra.mxu0 0.0
        %1059 = vmatpush.msra.mxu0 0.0
        %1060 = vmatpush.msra.mxu0 0.0
        %1061 = vmatpush.msra.mxu0 0.0
        %1062 = vmatpush.msra.mxu0 0.0
        %1063 = vmatpush.msra.mxu0 0.0
        %1064 = vmatpush.msra.mxu0 0.0
        %1065 = vmatpush.msra.mxu0 0.0
        %1066 = vmatpush.msra.mxu0 %v528
        %1067 = vmatmul.f32.gmra.mxu0 %v1049
        %v1068 = vpop.f32.mrf.mxu0
        %v1069 = vadd.f32 0.0, %v1068
        %1070 = vdwg.mxu0
        %1071 = vxpose.xlu0.b32.start [1/16] %v908, 128
        %1072 = vxpose.xlu0.b32.cont [2/16] 0.0, 128
        %1073 = vxpose.xlu0.b32.cont [3/16] 0.0, 128
        %1074 = vxpose.xlu0.b32.cont [4/16] 0.0, 128
        %1075 = vxpose.xlu0.b32.cont [5/16] 0.0, 128
        %1076 = vxpose.xlu0.b32.cont [6/16] 0.0, 128
        %1077 = vxpose.xlu0.b32.cont [7/16] 0.0, 128
        %1078 = vxpose.xlu0.b32.cont [8/16] 0.0, 128
        %1079 = vxpose.xlu0.b32.cont [9/16] 0.0, 128
        %1080 = vxpose.xlu0.b32.cont [10/16] 0.0, 128
        %1081 = vxpose.xlu0.b32.cont [11/16] 0.0, 128
        %1082 = vxpose.xlu0.b32.cont [12/16] 0.0, 128
        %1083 = vxpose.xlu0.b32.cont [13/16] 0.0, 128
        %1084 = vxpose.xlu0.b32.cont [14/16] 0.0, 128
        %1085 = vxpose.xlu0.b32.cont [15/16] 0.0, 128
        %1086 = vxpose.xlu0.b32.end [16/16] 0.0, 128
        %v1087 = vpop.trf.xlu0
        %v1088 = vpop.trf.xlu0
        %v1089 = vpop.trf.xlu0
        %v1090 = vpop.trf.xlu0
        %v1091 = vpop.trf.xlu0
        %v1092 = vpop.trf.xlu0
        %v1093 = vpop.trf.xlu0
        %v1094 = vpop.trf.xlu0
        %v1095 = vpop.trf.xlu0
        %v1096 = vpop.trf.xlu0
        %v1097 = vpop.trf.xlu0
        %v1098 = vpop.trf.xlu0
        %v1099 = vpop.trf.xlu0
        %v1100 = vpop.trf.xlu0
        %v1101 = vpop.trf.xlu0
        %v1102 = vpop.trf.xlu0
        %1103 = vxpose.xlu0.b32.start [1/16] %v931, 128
        %1104 = vxpose.xlu0.b32.cont [2/16] 0.0, 128
        %1105 = vxpose.xlu0.b32.cont [3/16] 0.0, 128
        %1106 = vxpose.xlu0.b32.cont [4/16] 0.0, 128
        %1107 = vxpose.xlu0.b32.cont [5/16] 0.0, 128
        %1108 = vxpose.xlu0.b32.cont [6/16] 0.0, 128
        %1109 = vxpose.xlu0.b32.cont [7/16] 0.0, 128
        %1110 = vxpose.xlu0.b32.cont [8/16] 0.0, 128
        %1111 = vxpose.xlu0.b32.cont [9/16] 0.0, 128
        %1112 = vxpose.xlu0.b32.cont [10/16] 0.0, 128
        %1113 = vxpose.xlu0.b32.cont [11/16] 0.0, 128
        %1114 = vxpose.xlu0.b32.cont [12/16] 0.0, 128
        %1115 = vxpose.xlu0.b32.cont [13/16] 0.0, 128
        %1116 = vxpose.xlu0.b32.cont [14/16] 0.0, 128
        %1117 = vxpose.xlu0.b32.cont [15/16] 0.0, 128
        %1118 = vxpose.xlu0.b32.end [16/16] 0.0, 128
        %v1119 = vpop.trf.xlu0
        %v1120 = vpop.trf.xlu0
        %v1121 = vpop.trf.xlu0
        %v1122 = vpop.trf.xlu0
        %v1123 = vpop.trf.xlu0
        %v1124 = vpop.trf.xlu0
        %v1125 = vpop.trf.xlu0
        %v1126 = vpop.trf.xlu0
        %v1127 = vpop.trf.xlu0
        %v1128 = vpop.trf.xlu0
        %v1129 = vpop.trf.xlu0
        %v1130 = vpop.trf.xlu0
        %v1131 = vpop.trf.xlu0
        %v1132 = vpop.trf.xlu0
        %v1133 = vpop.trf.xlu0
        %v1134 = vpop.trf.xlu0
        %1135 = vxpose.xlu0.b32.start [1/16] %v954, 128
        %1136 = vxpose.xlu0.b32.cont [2/16] 0.0, 128
        %1137 = vxpose.xlu0.b32.cont [3/16] 0.0, 128
        %1138 = vxpose.xlu0.b32.cont [4/16] 0.0, 128
        %1139 = vxpose.xlu0.b32.cont [5/16] 0.0, 128
        %1140 = vxpose.xlu0.b32.cont [6/16] 0.0, 128
        %1141 = vxpose.xlu0.b32.cont [7/16] 0.0, 128
        %1142 = vxpose.xlu0.b32.cont [8/16] 0.0, 128
        %1143 = vxpose.xlu0.b32.cont [9/16] 0.0, 128
        %1144 = vxpose.xlu0.b32.cont [10/16] 0.0, 128
        %1145 = vxpose.xlu0.b32.cont [11/16] 0.0, 128
        %1146 = vxpose.xlu0.b32.cont [12/16] 0.0, 128
        %1147 = vxpose.xlu0.b32.cont [13/16] 0.0, 128
        %1148 = vxpose.xlu0.b32.cont [14/16] 0.0, 128
        %1149 = vxpose.xlu0.b32.cont [15/16] 0.0, 128
        %1150 = vxpose.xlu0.b32.end [16/16] 0.0, 128
        %v1151 = vpop.trf.xlu0
        %v1152 = vpop.trf.xlu0
        %v1153 = vpop.trf.xlu0
        %v1154 = vpop.trf.xlu0
        %v1155 = vpop.trf.xlu0
        %v1156 = vpop.trf.xlu0
        %v1157 = vpop.trf.xlu0
        %v1158 = vpop.trf.xlu0
        %v1159 = vpop.trf.xlu0
        %v1160 = vpop.trf.xlu0
        %v1161 = vpop.trf.xlu0
        %v1162 = vpop.trf.xlu0
        %v1163 = vpop.trf.xlu0
        %v1164 = vpop.trf.xlu0
        %v1165 = vpop.trf.xlu0
        %v1166 = vpop.trf.xlu0
        %1167 = vxpose.xlu0.b32.start [1/16] %v977, 128
        %1168 = vxpose.xlu0.b32.cont [2/16] 0.0, 128
        %1169 = vxpose.xlu0.b32.cont [3/16] 0.0, 128
        %1170 = vxpose.xlu0.b32.cont [4/16] 0.0, 128
        %1171 = vxpose.xlu0.b32.cont [5/16] 0.0, 128
        %1172 = vxpose.xlu0.b32.cont [6/16] 0.0, 128
        %1173 = vxpose.xlu0.b32.cont [7/16] 0.0, 128
        %1174 = vxpose.xlu0.b32.cont [8/16] 0.0, 128
        %1175 = vxpose.xlu0.b32.cont [9/16] 0.0, 128
        %1176 = vxpose.xlu0.b32.cont [10/16] 0.0, 128
        %1177 = vxpose.xlu0.b32.cont [11/16] 0.0, 128
        %1178 = vxpose.xlu0.b32.cont [12/16] 0.0, 128
        %1179 = vxpose.xlu0.b32.cont [13/16] 0.0, 128
        %1180 = vxpose.xlu0.b32.cont [14/16] 0.0, 128
        %1181 = vxpose.xlu0.b32.cont [15/16] 0.0, 128
        %1182 = vxpose.xlu0.b32.end [16/16] 0.0, 128
        %v1183 = vpop.trf.xlu0
        %v1184 = vpop.trf.xlu0
        %v1185 = vpop.trf.xlu0
        %v1186 = vpop.trf.xlu0
        %v1187 = vpop.trf.xlu0
        %v1188 = vpop.trf.xlu0
        %v1189 = vpop.trf.xlu0
        %v1190 = vpop.trf.xlu0
        %v1191 = vpop.trf.xlu0
        %v1192 = vpop.trf.xlu0
        %v1193 = vpop.trf.xlu0
        %v1194 = vpop.trf.xlu0
        %v1195 = vpop.trf.xlu0
        %v1196 = vpop.trf.xlu0
        %v1197 = vpop.trf.xlu0
        %v1198 = vpop.trf.xlu0
        %1199 = vxpose.xlu0.b32.start [1/16] %v1000, 128
        %1200 = vxpose.xlu0.b32.cont [2/16] 0.0, 128
        %1201 = vxpose.xlu0.b32.cont [3/16] 0.0, 128
        %1202 = vxpose.xlu0.b32.cont [4/16] 0.0, 128
        %1203 = vxpose.xlu0.b32.cont [5/16] 0.0, 128
        %1204 = vxpose.xlu0.b32.cont [6/16] 0.0, 128
        %1205 = vxpose.xlu0.b32.cont [7/16] 0.0, 128
        %1206 = vxpose.xlu0.b32.cont [8/16] 0.0, 128
        %1207 = vxpose.xlu0.b32.cont [9/16] 0.0, 128
        %1208 = vxpose.xlu0.b32.cont [10/16] 0.0, 128
        %1209 = vxpose.xlu0.b32.cont [11/16] 0.0, 128
        %1210 = vxpose.xlu0.b32.cont [12/16] 0.0, 128
        %1211 = vxpose.xlu0.b32.cont [13/16] 0.0, 128
        %1212 = vxpose.xlu0.b32.cont [14/16] 0.0, 128
        %1213 = vxpose.xlu0.b32.cont [15/16] 0.0, 128
        %1214 = vxpose.xlu0.b32.end [16/16] 0.0, 128
        %v1215 = vpop.trf.xlu0
        %v1216 = vpop.trf.xlu0
        %v1217 = vpop.trf.xlu0
        %v1218 = vpop.trf.xlu0
        %v1219 = vpop.trf.xlu0
        %v1220 = vpop.trf.xlu0
        %v1221 = vpop.trf.xlu0
        %v1222 = vpop.trf.xlu0
        %v1223 = vpop.trf.xlu0
        %v1224 = vpop.trf.xlu0
        %v1225 = vpop.trf.xlu0
        %v1226 = vpop.trf.xlu0
        %v1227 = vpop.trf.xlu0
        %v1228 = vpop.trf.xlu0
        %v1229 = vpop.trf.xlu0
        %v1230 = vpop.trf.xlu0
        %1231 = vxpose.xlu0.b32.start [1/16] %v1023, 128
        %1232 = vxpose.xlu0.b32.cont [2/16] 0.0, 128
        %1233 = vxpose.xlu0.b32.cont [3/16] 0.0, 128
        %1234 = vxpose.xlu0.b32.cont [4/16] 0.0, 128
        %1235 = vxpose.xlu0.b32.cont [5/16] 0.0, 128
        %1236 = vxpose.xlu0.b32.cont [6/16] 0.0, 128
        %1237 = vxpose.xlu0.b32.cont [7/16] 0.0, 128
        %1238 = vxpose.xlu0.b32.cont [8/16] 0.0, 128
        %1239 = vxpose.xlu0.b32.cont [9/16] 0.0, 128
        %1240 = vxpose.xlu0.b32.cont [10/16] 0.0, 128
        %1241 = vxpose.xlu0.b32.cont [11/16] 0.0, 128
        %1242 = vxpose.xlu0.b32.cont [12/16] 0.0, 128
        %1243 = vxpose.xlu0.b32.cont [13/16] 0.0, 128
        %1244 = vxpose.xlu0.b32.cont [14/16] 0.0, 128
        %1245 = vxpose.xlu0.b32.cont [15/16] 0.0, 128
        %1246 = vxpose.xlu0.b32.end [16/16] 0.0, 128
        %v1247 = vpop.trf.xlu0
        %v1248 = vpop.trf.xlu0
        %v1249 = vpop.trf.xlu0
        %v1250 = vpop.trf.xlu0
        %v1251 = vpop.trf.xlu0
        %v1252 = vpop.trf.xlu0
        %v1253 = vpop.trf.xlu0
        %v1254 = vpop.trf.xlu0
        %v1255 = vpop.trf.xlu0
        %v1256 = vpop.trf.xlu0
        %v1257 = vpop.trf.xlu0
        %v1258 = vpop.trf.xlu0
        %v1259 = vpop.trf.xlu0
        %v1260 = vpop.trf.xlu0
        %v1261 = vpop.trf.xlu0
        %v1262 = vpop.trf.xlu0
        %1263 = vxpose.xlu0.b32.start [1/16] %v1046, 128
        %1264 = vxpose.xlu0.b32.cont [2/16] 0.0, 128
        %1265 = vxpose.xlu0.b32.cont [3/16] 0.0, 128
        %1266 = vxpose.xlu0.b32.cont [4/16] 0.0, 128
        %1267 = vxpose.xlu0.b32.cont [5/16] 0.0, 128
        %1268 = vxpose.xlu0.b32.cont [6/16] 0.0, 128
        %1269 = vxpose.xlu0.b32.cont [7/16] 0.0, 128
        %1270 = vxpose.xlu0.b32.cont [8/16] 0.0, 128
        %1271 = vxpose.xlu0.b32.cont [9/16] 0.0, 128
        %1272 = vxpose.xlu0.b32.cont [10/16] 0.0, 128
        %1273 = vxpose.xlu0.b32.cont [11/16] 0.0, 128
        %1274 = vxpose.xlu0.b32.cont [12/16] 0.0, 128
        %1275 = vxpose.xlu0.b32.cont [13/16] 0.0, 128
        %1276 = vxpose.xlu0.b32.cont [14/16] 0.0, 128
        %1277 = vxpose.xlu0.b32.cont [15/16] 0.0, 128
        %1278 = vxpose.xlu0.b32.end [16/16] 0.0, 128
        %v1279 = vpop.trf.xlu0
        %v1280 = vpop.trf.xlu0
        %v1281 = vpop.trf.xlu0
        %v1282 = vpop.trf.xlu0
        %v1283 = vpop.trf.xlu0
        %v1284 = vpop.trf.xlu0
        %v1285 = vpop.trf.xlu0
        %v1286 = vpop.trf.xlu0
        %v1287 = vpop.trf.xlu0
        %v1288 = vpop.trf.xlu0
        %v1289 = vpop.trf.xlu0
        %v1290 = vpop.trf.xlu0
        %v1291 = vpop.trf.xlu0
        %v1292 = vpop.trf.xlu0
        %v1293 = vpop.trf.xlu0
        %v1294 = vpop.trf.xlu0
        %1295 = vxpose.xlu0.b32.start [1/16] %v1069, 128
        %1296 = vxpose.xlu0.b32.cont [2/16] 0.0, 128
        %1297 = vxpose.xlu0.b32.cont [3/16] 0.0, 128
        %1298 = vxpose.xlu0.b32.cont [4/16] 0.0, 128
        %1299 = vxpose.xlu0.b32.cont [5/16] 0.0, 128
        %1300 = vxpose.xlu0.b32.cont [6/16] 0.0, 128
        %1301 = vxpose.xlu0.b32.cont [7/16] 0.0, 128
        %1302 = vxpose.xlu0.b32.cont [8/16] 0.0, 128
        %1303 = vxpose.xlu0.b32.cont [9/16] 0.0, 128
        %1304 = vxpose.xlu0.b32.cont [10/16] 0.0, 128
        %1305 = vxpose.xlu0.b32.cont [11/16] 0.0, 128
        %1306 = vxpose.xlu0.b32.cont [12/16] 0.0, 128
        %1307 = vxpose.xlu0.b32.cont [13/16] 0.0, 128
        %1308 = vxpose.xlu0.b32.cont [14/16] 0.0, 128
        %1309 = vxpose.xlu0.b32.cont [15/16] 0.0, 128
        %1310 = vxpose.xlu0.b32.end [16/16] 0.0, 128
        %v1311 = vpop.trf.xlu0
        %v1312 = vpop.trf.xlu0
        %v1313 = vpop.trf.xlu0
        %v1314 = vpop.trf.xlu0
        %v1315 = vpop.trf.xlu0
        %v1316 = vpop.trf.xlu0
        %v1317 = vpop.trf.xlu0
        %v1318 = vpop.trf.xlu0
        %v1319 = vpop.trf.xlu0
        %v1320 = vpop.trf.xlu0
        %v1321 = vpop.trf.xlu0
        %v1322 = vpop.trf.xlu0
        %v1323 = vpop.trf.xlu0
        %v1324 = vpop.trf.xlu0
        %v1325 = vpop.trf.xlu0
        %v1326 = vpop.trf.xlu0
        %1327 = vxpose.xlu0.b32.start [1/16] %v1087, 128
        %1328 = vxpose.xlu0.b32.cont [2/16] %v1119, 128
        %1329 = vxpose.xlu0.b32.cont [3/16] %v1151, 128
        %1330 = vxpose.xlu0.b32.cont [4/16] %v1183, 128
        %1331 = vxpose.xlu0.b32.cont [5/16] 0.0, 128
        %1332 = vxpose.xlu0.b32.cont [6/16] 0.0, 128
        %1333 = vxpose.xlu0.b32.cont [7/16] 0.0, 128
        %1334 = vxpose.xlu0.b32.cont [8/16] 0.0, 128
        %1335 = vxpose.xlu0.b32.cont [9/16] 0.0, 128
        %1336 = vxpose.xlu0.b32.cont [10/16] 0.0, 128
        %1337 = vxpose.xlu0.b32.cont [11/16] 0.0, 128
        %1338 = vxpose.xlu0.b32.cont [12/16] 0.0, 128
        %1339 = vxpose.xlu0.b32.cont [13/16] 0.0, 128
        %1340 = vxpose.xlu0.b32.cont [14/16] 0.0, 128
        %1341 = vxpose.xlu0.b32.cont [15/16] 0.0, 128
        %1342 = vxpose.xlu0.b32.end [16/16] 0.0, 128
        %v1343 = vpop.trf.xlu0
        %v1344 = vpop.trf.xlu0
        %v1345 = vpop.trf.xlu0
        %v1346 = vpop.trf.xlu0
        %v1347 = vpop.trf.xlu0
        %v1348 = vpop.trf.xlu0
        %v1349 = vpop.trf.xlu0
        %v1350 = vpop.trf.xlu0
        %v1351 = vpop.trf.xlu0
        %v1352 = vpop.trf.xlu0
        %v1353 = vpop.trf.xlu0
        %v1354 = vpop.trf.xlu0
        %v1355 = vpop.trf.xlu0
        %v1356 = vpop.trf.xlu0
        %v1357 = vpop.trf.xlu0
        %v1358 = vpop.trf.xlu0
        %1359 = vxpose.xlu0.b32.start [1/16] %v1215, 128
        %1360 = vxpose.xlu0.b32.cont [2/16] %v1247, 128
        %1361 = vxpose.xlu0.b32.cont [3/16] %v1279, 128
        %1362 = vxpose.xlu0.b32.cont [4/16] %v1311, 128
        %1363 = vxpose.xlu0.b32.cont [5/16] 0.0, 128
        %1364 = vxpose.xlu0.b32.cont [6/16] 0.0, 128
        %1365 = vxpose.xlu0.b32.cont [7/16] 0.0, 128
        %1366 = vxpose.xlu0.b32.cont [8/16] 0.0, 128
        %1367 = vxpose.xlu0.b32.cont [9/16] 0.0, 128
        %1368 = vxpose.xlu0.b32.cont [10/16] 0.0, 128
        %1369 = vxpose.xlu0.b32.cont [11/16] 0.0, 128
        %1370 = vxpose.xlu0.b32.cont [12/16] 0.0, 128
        %1371 = vxpose.xlu0.b32.cont [13/16] 0.0, 128
        %1372 = vxpose.xlu0.b32.cont [14/16] 0.0, 128
        %1373 = vxpose.xlu0.b32.cont [15/16] 0.0, 128
        %1374 = vxpose.xlu0.b32.end [16/16] 0.0, 128
        %v1375 = vpop.trf.xlu0
        %v1376 = vpop.trf.xlu0
        %v1377 = vpop.trf.xlu0
        %v1378 = vpop.trf.xlu0
        %v1379 = vpop.trf.xlu0
        %v1380 = vpop.trf.xlu0
        %v1381 = vpop.trf.xlu0
        %v1382 = vpop.trf.xlu0
        %v1383 = vpop.trf.xlu0
        %v1384 = vpop.trf.xlu0
        %v1385 = vpop.trf.xlu0
        %v1386 = vpop.trf.xlu0
        %v1387 = vpop.trf.xlu0
        %v1388 = vpop.trf.xlu0
        %v1389 = vpop.trf.xlu0
        %v1390 = vpop.trf.xlu0
        %v1391 = vpack.c.bf16 %v1375, %v1343
        %v1392 = vld [vmem:[%s402] sm:$0xf]
        %v1393 = vld [vmem:[%s402 + $0x4] sm:$0xf]
        %v1394 = vld [vmem:[%s402 + $0x8] sm:$0xf]
        %v1395 = vld [vmem:[%s402 + $0xc] sm:$0xf]
        %v1396 = vld [vmem:[%s405] sm:$0x1]
        %v1398 = vperm.slane %v1396, 0
        %v1404 = vunpack.c.l.b16 %v1392
        %v1405 = vunpack.c.l.b16 %v1393
        %v1406 = vunpack.c.l.b16 %v1394
        %v1407 = vunpack.c.l.b16 %v1395
        %v1408 = vpack.c.b16 %v1405, %v1404
        %v1409 = vpack.c.b16 %v1407, %v1406
        %v1413 = vsel %vm451, %v1391, 0
        %1415 = vmatpush.bf16.msra.mxu0 0
        %1416 = vmatpush.bf16.msra.mxu0 0
        %1417 = vmatpush.bf16.msra.mxu0 0
        %1418 = vmatpush.bf16.msra.mxu0 0
        %1419 = vmatpush.bf16.msra.mxu0 0
        %1420 = vmatpush.bf16.msra.mxu0 0
        %1421 = vmatpush.bf16.msra.mxu0 %v1409
        %1422 = vmatpush.bf16.msra.mxu0 %v1408
        %1423 = vmatmul.bf16.gmra.mxu0 %v1413
        %v1424 = vpop.f32.mrf.mxu0
        %v1425 = vadd.f32 %v1398, %v1424
        %v1426 = vpop.f32.mrf.mxu0
        %v1427 = vadd.f32 %v1398, %v1426
        %1428 = vdwg.mxu0
        %v1429 = vadd.f32 %v1425, %v428
        %v1430 = vadd.f32 %v1427, %v429
        %v1431 = vsel %vm451, %v1429, 0.0
        %1432 = vadd.xlane.f32.xlu0 %v1431
        %v1433 = vpop.xlane.xlu0 %1432
        %v1434 = vsel %vm451, %v1430, 0.0
        %1435 = vadd.xlane.f32.xlu0 %v1434
        %v1436 = vpop.xlane.xlu0 %1435
        %v1437 = vrcp.pop 32.0
        %v1438 = vmul.f32 32.0, %v1437
        %v1439 = vsub.f32 1.0, %v1438
        %v1440 = vmul.f32 %v1437, %v1439
        %v1441 = vadd.f32 %v1437, %v1440
        %vm1442 = vweird.f32 %v1437
        %v1443 = vsel %vm1442, %v1437, %v1441
        %v1444 = vmul.f32 %v1433, %v1443
        %v1445 = vmul.f32 %v1436, %v1443
        %v1446 = vsub.f32 %v1429, %v1444
        %v1447 = vsub.f32 %v1430, %v1445
        %v1448 = vmul.f32 %v1446, %v1446
        %v1449 = vmul.f32 %v1447, %v1447
        %v1450 = vsel %vm451, %v1448, 0.0
        %1451 = vadd.xlane.f32.xlu0 %v1450
        %v1452 = vpop.xlane.xlu0 %1451
        %v1453 = vsel %vm451, %v1449, 0.0
        %1454 = vadd.xlane.f32.xlu0 %v1453
        %v1455 = vpop.xlane.xlu0 %1454
        %v1456 = vmul.f32 %v1452, %v1443
        %v1457 = vmul.f32 %v1455, %v1443
        %v1458 = vadd.f32 %v1456, 1e-06
        %v1459 = vadd.f32 %v1457, 1e-06
        %v1460 = vrsqrt.pop %v1458
        %v1461 = vmul.f32 %v1460, %v1458
        %v1462 = vmul.f32 %v1461, %v1460
        %v1463 = vmul.f32 0.5, %v1462
        %v1464 = vsub.f32 1.5, %v1463
        %v1465 = vmul.f32 %v1460, %v1464
        %vm1466 = vweird.f32 %v1458
        %vm1467 = vweird.f32 %v1460
        %vm1468 = vmor %vm1466, %vm1467
        %v1469 = vsel %vm1468, %v1460, %v1465
        %v1470 = vrsqrt.pop %v1459
        %v1471 = vmul.f32 %v1470, %v1459
        %v1472 = vmul.f32 %v1471, %v1470
        %v1473 = vmul.f32 0.5, %v1472
        %v1474 = vsub.f32 1.5, %v1473
        %v1475 = vmul.f32 %v1470, %v1474
        %vm1476 = vweird.f32 %v1459
        %vm1477 = vweird.f32 %v1470
        %vm1478 = vmor %vm1476, %vm1477
        %v1479 = vsel %vm1478, %v1470, %v1475
        %v1480 = vmul.f32 %v1446, %v1469
        %v1481 = vmul.f32 %v1447, %v1479
        %v1482 = vpack.c.bf16 %v1481, %v1480
        %v1483 = vld [vmem:[%s410] sm:$0xf]
        %v1484 = vld [vmem:[%s410 + $0x4] sm:$0xf]
        %v1485 = vld [vmem:[%s410 + $0x8] sm:$0xf]
        %v1486 = vld [vmem:[%s410 + $0xc] sm:$0xf]
        %v1487 = vld [vmem:[%s413] sm:$0x1]
        %v1489 = vperm.slane %v1487, 0
        %v1495 = vunpack.c.l.b16 %v1483
        %v1496 = vunpack.c.l.b16 %v1484
        %v1497 = vunpack.c.l.b16 %v1485
        %v1498 = vunpack.c.l.b16 %v1486
        %v1499 = vpack.c.b16 %v1496, %v1495
        %v1500 = vpack.c.b16 %v1498, %v1497
        %v1504 = vsel %vm451, %v1482, 0
        %1506 = vmatpush.bf16.msra.mxu0 0
        %1507 = vmatpush.bf16.msra.mxu0 0
        %1508 = vmatpush.bf16.msra.mxu0 0
        %1509 = vmatpush.bf16.msra.mxu0 0
        %1510 = vmatpush.bf16.msra.mxu0 0
        %1511 = vmatpush.bf16.msra.mxu0 0
        %1512 = vmatpush.bf16.msra.mxu0 %v1500
        %1513 = vmatpush.bf16.msra.mxu0 %v1499
        %1514 = vmatmul.bf16.gmra.mxu0 %v1504
        %v1515 = vpop.f32.mrf.mxu0
        %v1516 = vadd.f32 %v1489, %v1515
        %v1517 = vpop.f32.mrf.mxu0
        %v1518 = vadd.f32 %v1489, %v1517
        %1519 = vdwg.mxu0
        %v1520 = vadd.f32 %v1480, %v1516
        %v1521 = vadd.f32 %v1481, %v1518
        %v1522 = vsel %vm451, %v1520, 0.0
        %1523 = vadd.xlane.f32.xlu0 %v1522
        %v1524 = vpop.xlane.xlu0 %1523
        %v1525 = vsel %vm451, %v1521, 0.0
        %1526 = vadd.xlane.f32.xlu0 %v1525
        %v1527 = vpop.xlane.xlu0 %1526
        %v1528 = vmul.f32 %v1524, %v1443
        %v1529 = vmul.f32 %v1527, %v1443
        %v1530 = vsub.f32 %v1520, %v1528
        %v1531 = vsub.f32 %v1521, %v1529
        %v1532 = vmul.f32 %v1530, %v1530
        %v1533 = vmul.f32 %v1531, %v1531
        %v1534 = vsel %vm451, %v1532, 0.0
        %1535 = vadd.xlane.f32.xlu0 %v1534
        %v1536 = vpop.xlane.xlu0 %1535
        %v1537 = vsel %vm451, %v1533, 0.0
        %1538 = vadd.xlane.f32.xlu0 %v1537
        %v1539 = vpop.xlane.xlu0 %1538
        %v1540 = vmul.f32 %v1536, %v1443
        %v1541 = vmul.f32 %v1539, %v1443
        %v1542 = vadd.f32 %v1540, 1e-06
        %v1543 = vadd.f32 %v1541, 1e-06
        %v1544 = vrsqrt.pop %v1542
        %v1545 = vmul.f32 %v1544, %v1542
        %v1546 = vmul.f32 %v1545, %v1544
        %v1547 = vmul.f32 0.5, %v1546
        %v1548 = vsub.f32 1.5, %v1547
        %v1549 = vmul.f32 %v1544, %v1548
        %vm1550 = vweird.f32 %v1542
        %vm1551 = vweird.f32 %v1544
        %vm1552 = vmor %vm1550, %vm1551
        %v1553 = vsel %vm1552, %v1544, %v1549
        %v1554 = vrsqrt.pop %v1543
        %v1555 = vmul.f32 %v1554, %v1543
        %v1556 = vmul.f32 %v1555, %v1554
        %v1557 = vmul.f32 0.5, %v1556
        %v1558 = vsub.f32 1.5, %v1557
        %v1559 = vmul.f32 %v1554, %v1558
        %vm1560 = vweird.f32 %v1543
        %vm1561 = vweird.f32 %v1554
        %vm1562 = vmor %vm1560, %vm1561
        %v1563 = vsel %vm1562, %v1554, %v1559
        %v1564 = vmul.f32 %v1530, %v1553
        %v1565 = vmul.f32 %v1531, %v1563
        %1566 = vst.msk [vmem:[#allocation2] sm:$0xff] %vm451, %v1564
        %1567 = vst.msk [vmem:[#allocation2 + $0x8] sm:$0xff] %vm451, %v1565
        %1568 = vst.msk [vmem:[#allocation3] sm:$0xff] %vm451, %v1564
        %1569 = vst.msk [vmem:[#allocation3 + $0x8] sm:$0xff] %vm451, %v1565
        // Predicated region
        $region61: #{tgsa_forward.1} parent=55 // pred_check
          %p1570 = pneg %p258
        $region62: #{tgsa_forward.1} parent=55 // pred_check_branch
          %1572 = sbr.rel (%p1570) target = $region64
        $region63: #{tgsa_forward.1} parent=55 // pred_region
          %1574 = vsyncadd [#allocation4], 0
          %s1575 = sshll.u32 [#allocation3], 4
          %s1576 = int_to_ptr.vmem [resolvable:$true] %s1575
          %s1577 = sshll.u32 %s9, 4
          %s1578 = int_to_ptr.hbm [resolvable:$true] %s1577
          %1583 = dma.vmem_to_hbm [thread:$0]  %s1576, 256, %s1578, [#allocation4], 128, 128, 8
        $region64: #{tgsa_forward.1} parent=55 // pred_fallthru
          _
        // Predicated region
        $region65: #{tgsa_forward.1} parent=55 // pred_check
          %p1584 = pneg %p258
        $region66: #{tgsa_forward.1} parent=55 // pred_check_branch
          %1586 = sbr.rel (%p1584) target = $region68
        $region67: #{tgsa_forward.1} parent=55 // pred_region
          %1588 = dma.done [#allocation4], 256
        $region68: #{tgsa_forward.1} parent=55 // pred_fallthru
          _
      $region56: #{tgsa_forward.1} parent=5 // pred_fallthru
        _
      %p1589 = scmp.le.s32.totalorder 2, %s16
      // Predicated region
      $region69: #{tgsa_forward.1} parent=5 // pred_check
        %p1590 = pneg %p1589
      $region70: #{tgsa_forward.1} parent=5 // pred_check_branch
        %1592 = sbr.rel (%p1590) target = $region72
      $region71: #{tgsa_forward.1} parent=5 // pred_region
        %s1593 = ssub.s32 %s16, 2
      $region72: #{tgsa_forward.1} parent=5 // pred_fallthru
        _
    $region6: #{tgsa_forward.1} parent=1 // loop_footer
      %s20 = sadd.s32 1, %s16
    $region7: #{tgsa_forward.1} parent=1 // loop_footer_branch
      %15 = sbr.rel target = $region3
    $region8: #{tgsa_forward.1} parent=1 // loop_exit
      _
    %1594 = vsyncpa [#allocation4], 1
    %s1595 = scalar_lea.sflag [#allocation4], 1
    %1596 = vsyncpa %s1595, 1

</llo_original>
